<compile_context>
chip_gen: v5e
topology: v5e:2x2
jax: 0.10.0
libtpu: 0.0.40
codegen_flags: <defaults>
</compile_context>

<pallas_src>
import functools

import jax
import jax.numpy as jnp
from jax import lax
from jax.experimental import pallas as pl
from jax.experimental.pallas import tpu as pltpu


def lstm_decoder_kernel(x_ref, wih_ref, whh_ref, b_ref, wout_ref, bout_ref,
                        out_ref, pre_scr, hall_scr, *, T, B_pad, H_pad, unroll):
    """LSTM decoder forward; V-tiled output projection over grid axis 0.

    x_ref:    (T*B_pad, E)        time-major inputs, compute_dtype
    wih_ref:  (E, 4*H_pad)        input->gates weights, gate order [i,f,o,g]
    whh_ref:  (H_pad, 4*H_pad)    hidden->gates weights, gate order [i,f,o,g]
    b_ref:    (1, 4*H_pad)        bias_ih + bias_hh (f32)
    wout_ref: (H_pad, TN)         current vocab tile of linear.weight.T
    bout_ref: (1, TN)             current vocab tile of linear.bias (f32)
    out_ref:  (T*B_pad, TN)       current logits tile (f32, lane-dense)
    pre_scr:  (T*B_pad, 4*H_pad)  hoisted input projection (f32 scratch)
    hall_scr: (T*B_pad, H_pad)    all hidden states (compute_dtype scratch)
    """
    H3 = 3 * H_pad

    # Prologue + recurrence run once (first vocab tile); scratch persists.
    @pl.when(pl.program_id(0) == 0)
    def _():
        # Hoisted input projection for all T steps in one MXU call.
        pre_scr[...] = (jnp.dot(x_ref[...], wih_ref[...],
                                preferred_element_type=jnp.float32)
                        + b_ref[...])

        def step(t, carry):
            h, c = carry                                   # f32 vreg carries
            row = pl.multiple_of(t * B_pad, B_pad)         # sublane-aligned
            # TODO(synk): hold whh in MXU weight registers across steps
            # (pltpu.matmul_push_rhs/acc_lhs/pop) once RHS tiling over the
            # 4*H_pad axis is wired up; jnp.dot re-pushes the RHS each step.
            gates = (pre_scr[pl.ds(row, B_pad), :]
                     + jnp.dot(h.astype(whh_ref.dtype), whh_ref[...],
                               preferred_element_type=jnp.float32))
            # Gate order repacked to [i, f, o, g]: one sigmoid, one tanh.
            ifo = jax.nn.sigmoid(gates[:, :H3])
            g_g = jnp.tanh(gates[:, H3:])
            i_g = ifo[:, :H_pad]
            f_g = ifo[:, H_pad:2 * H_pad]
            o_g = ifo[:, 2 * H_pad:]
            c_new = f_g * c + i_g * g_g                    # f32 cell state
            h_new = o_g * jnp.tanh(c_new)
            hall_scr[pl.ds(row, B_pad), :] = h_new.astype(hall_scr.dtype)
            return h_new, c_new

        h0 = jnp.zeros((B_pad, H_pad), jnp.float32)
        c0 = jnp.zeros((B_pad, H_pad), jnp.float32)
        lax.fori_loop(0, T, step, (h0, c0), unroll=unroll)

    # Every grid step: one lane-dense logits tile (batched over all T*B rows).
    out_ref[...] = (jnp.dot(hall_scr[...], wout_ref[...],
                            preferred_element_type=jnp.float32)
                    + bout_ref[...]).astype(out_ref.dtype)


def _round_up(x, m):
    return ((x + m - 1) // m) * m


def decoder_rnn_forward(features, captions, params, *,
                        compute_dtype=jnp.bfloat16, tn=512):
    """features: (B, E) float32; captions: (B, L) int32.  Returns (B, L, V)."""
    emb_tab = params["embedding"]                        # (V, E)
    embeds = emb_tab[captions[:, :-1]]                   # (B, L-1, E) glue gather
    inputs = jnp.concatenate([features[:, None, :], embeds], axis=1)  # (B, T, E)
    x = jnp.transpose(inputs, (1, 0, 2)).astype(jnp.float32)          # (T, B, E)

    T, B, E = x.shape
    H = params["whh"].shape[0]
    V = params["wout"].shape[1]

    itemsize = jnp.dtype(compute_dtype).itemsize
    sub = 8 * (4 // itemsize)                  # sublane tile: 8 (f32) / 16 (bf16)
    B_pad = _round_up(B, sub)
    H_pad = _round_up(H, 128)                  # lane-aligned gate slices
    TN = min(tn, _round_up(V, 128))            # vocab tile (multiple of 128)
    V_pad = _round_up(V, TN)

    # --- Param prep (glue): gate repack [i,f,g,o] -> [i,f,o,g], H/V padding ---
    def repack_gates(w, axis):
        i_, f_, g_, o_ = jnp.split(w, 4, axis=axis)
        def pad_gate(blk):
            pw = [(0, 0)] * blk.ndim
            pw[axis] = (0, H_pad - H)
            return jnp.pad(blk, pw)
        return jnp.concatenate(
            [pad_gate(i_), pad_gate(f_), pad_gate(o_), pad_gate(g_)], axis=axis)

    wih = repack_gates(params["wih"], axis=1).astype(compute_dtype)      # (E, 4H_pad)
    whh = repack_gates(params["whh"], axis=1)                            # (H, 4H_pad)
    whh = jnp.pad(whh, ((0, H_pad - H), (0, 0))).astype(compute_dtype)   # (H_pad, 4H_pad)
    b_gates = repack_gates(params["b"], axis=1).astype(jnp.float32)      # (1, 4H_pad)
    wout = jnp.pad(params["wout"],
                   ((0, H_pad - H), (0, V_pad - V))).astype(compute_dtype)
    bout = jnp.pad(params["bout"], ((0, 0), (0, V_pad - V))).astype(jnp.float32)

    x_p = jnp.zeros((T, B_pad, E), jnp.float32).at[:, :B, :].set(x)
    x_flat = x_p.reshape(T * B_pad, E).astype(compute_dtype)

    # --- Unroll gating on vreg pressure (h,c carry must not blow the file) ---
    carry_bytes = 2 * B_pad * H_pad * 4
    unroll = True if carry_bytes <= 128 * 1024 else 2

    # --- Explicit VMEM budget (resident inputs + double-buffered tiles + scratch) ---
    resident = (T * B_pad * E * itemsize                 # x
                + E * 4 * H_pad * itemsize               # wih
                + H_pad * 4 * H_pad * itemsize           # whh
                + 4 * H_pad * 4                          # b
                + 2 * H_pad * TN * itemsize              # wout tile x2
                + 2 * TN * 4                             # bout tile x2
                + 2 * T * B_pad * TN * 4                 # out tile x2
                + T * B_pad * 4 * H_pad * 4              # pre_scr
                + T * B_pad * H_pad * itemsize)          # hall_scr
    vmem_limit = min(max(int(resident * 1.5) + (2 << 20), 32 << 20), 128 << 20)

    kernel = functools.partial(lstm_decoder_kernel,
                               T=T, B_pad=B_pad, H_pad=H_pad, unroll=unroll)

    grid = (V_pad // TN,)
    out_flat = pl.pallas_call(
        kernel,
        out_shape=jax.ShapeDtypeStruct((T * B_pad, V_pad), jnp.float32),
        grid_spec=pltpu.PrefetchScalarGridSpec(
            num_scalar_prefetch=0,
            grid=grid,
            in_specs=[
                pl.BlockSpec((T * B_pad, E), lambda j: (0, 0)),       # x (fetched once)
                pl.BlockSpec((E, 4 * H_pad), lambda j: (0, 0)),       # wih
                pl.BlockSpec((H_pad, 4 * H_pad), lambda j: (0, 0)),   # whh
                pl.BlockSpec((1, 4 * H_pad), lambda j: (0, 0)),       # b
                pl.BlockSpec((H_pad, TN), lambda j: (0, j)),          # wout tile
                pl.BlockSpec((1, TN), lambda j: (0, j)),              # bout tile
            ],
            out_specs=pl.BlockSpec((T * B_pad, TN), lambda j: (0, j)),
            scratch_shapes=[
                pltpu.VMEM((T * B_pad, 4 * H_pad), jnp.float32),      # pre-gates
                pltpu.VMEM((T * B_pad, H_pad), compute_dtype),        # hidden states
            ],
        ),
        # V axis must be "arbitrary": tiles j>0 consume scratch written at j==0.
        # TODO(synk): v7x dual-TC — replicate the recurrence per core (or add a
        # parallel batch-half axis for the epilogue) to use both TensorCores.
        compiler_params=pltpu.CompilerParams(
            dimension_semantics=("arbitrary",),
            vmem_limit_bytes=vmem_limit),
    )(x_flat, wih, whh, b_gates, wout, bout)

    out = out_flat.reshape(T, B_pad, V_pad)[:, :B, :V]     # strip padding
    # TODO(synk): for large V, have the consumer accept time-major (T, B, V) or
    # fuse the downstream softmax/argmax so this full-HBM relayout never lands.
    return jnp.transpose(out, (1, 0, 2))                   # (B, T, V)


def decoder_rnn_reference(features, captions, params, compute_dtype=jnp.float32):
    """Pure-JAX reference (same casting policy: matmul operands in
    compute_dtype, f32 accumulation, f32 gate math / cell state)."""
    emb = params["embedding"][captions[:, :-1]]
    inputs = jnp.concatenate([features[:, None, :], emb], axis=1)
    x = jnp.transpose(inputs, (1, 0, 2)).astype(jnp.float32)   # (T, B, E)
    B = x.shape[1]
    H = params["whh"].shape[0]
    dt = compute_dtype
    wih = params["wih"].astype(dt)
    whh = params["whh"].astype(dt)
    wout = params["wout"].astype(dt)

    def step(carry, x_t):
        h, c = carry
        gates = (jnp.dot(x_t.astype(dt), wih, preferred_element_type=jnp.float32)
                 + jnp.dot(h.astype(dt), whh, preferred_element_type=jnp.float32)
                 + params["b"])
        i = jax.nn.sigmoid(gates[:, 0 * H:1 * H])
        f = jax.nn.sigmoid(gates[:, 1 * H:2 * H])
        g = jnp.tanh(gates[:, 2 * H:3 * H])
        o = jax.nn.sigmoid(gates[:, 3 * H:4 * H])
        c = f * c + i * g
        h = o * jnp.tanh(c)
        out = (jnp.dot(h.astype(dt), wout, preferred_element_type=jnp.float32)
               + params["bout"])
        return (h, c), out

    init = (jnp.zeros((B, H), jnp.float32), jnp.zeros((B, H), jnp.float32))
    _, outs = lax.scan(step, init, x)
    return jnp.transpose(outs, (1, 0, 2))


def init_params(key, embed_size, hidden_size, vocab_size):
    ks = jax.random.split(key, 6)
    scale = 0.1
    return {
        "embedding": scale * jax.random.normal(ks[0], (vocab_size, embed_size),
                                               jnp.float32),
        "wih": scale * jax.random.normal(ks[1], (embed_size, 4 * hidden_size),
                                         jnp.float32),
        "whh": scale * jax.random.normal(ks[2], (hidden_size, 4 * hidden_size),
                                         jnp.float32),
        # bias = bias_ih + bias_hh, kept pre-summed as a single (1, 4H) row
        "b": scale * jax.random.normal(ks[3], (1, 4 * hidden_size), jnp.float32),
        "wout": scale * jax.random.normal(ks[4], (hidden_size, vocab_size),
                                          jnp.float32),
        "bout": scale * jax.random.normal(ks[5], (1, vocab_size), jnp.float32),
    }


if __name__ == "__main__":
    # Small shapes consistent with the module's forward:
    #   batch=2, embed=32, hidden=32, vocab=64, caption length=8 -> seq T=8
    B, E, H, V, L = 2, 32, 32, 64, 8

    key = jax.random.PRNGKey(0)
    k_feat, k_cap, k_par = jax.random.split(key, 3)

    features = jax.random.normal(k_feat, (B, E), jnp.float32)
    captions = jax.random.randint(k_cap, (B, L), 0, V, dtype=jnp.int32)
    params = init_params(k_par, E, H, V)

    # f32 MXU-operand path: tight check against the pure-JAX reference.
    out_f32 = jax.block_until_ready(
        decoder_rnn_forward(features, captions, params,
                            compute_dtype=jnp.float32))
    ref_f32 = decoder_rnn_reference(features, captions, params, jnp.float32)
    assert out_f32.shape == (B, L, V), out_f32.shape
    assert jnp.allclose(out_f32, ref_f32, atol=1e-3, rtol=1e-3), \
        "f32 path mismatch vs reference"

    # bf16 MXU-operand path (production default; f32 accumulation & gate math).
    out_bf16 = jax.block_until_ready(
        decoder_rnn_forward(features, captions, params,
                            compute_dtype=jnp.bfloat16))
    ref_bf16 = decoder_rnn_reference(features, captions, params, jnp.bfloat16)
    assert out_bf16.shape == (B, L, V), out_bf16.shape
    assert jnp.allclose(out_bf16, ref_bf16, atol=1e-2, rtol=1e-2), \
        "bf16 path mismatch vs reference"

    print("KERNEL_OK")
</pallas_src>

<mosaic_0001>
module attributes {stable_mosaic.version = 11 : i64} {
  func.func @lstm_decoder_kernel(%arg0: i32, %arg1: memref<64x32xf32, #tpu.memory_space<vmem>>, %arg2: memref<32x512xf32, #tpu.memory_space<vmem>>, %arg3: memref<128x512xf32, #tpu.memory_space<vmem>>, %arg4: memref<1x512xf32, #tpu.memory_space<vmem>>, %arg5: memref<128x128xf32, #tpu.memory_space<vmem>>, %arg6: memref<1x128xf32, #tpu.memory_space<vmem>>, %arg7: memref<64x128xf32, #tpu.memory_space<vmem>>, %arg8: memref<64x512xf32, #tpu.memory_space<vmem>>, %arg9: memref<64x128xf32, #tpu.memory_space<vmem>>) attributes {dimension_semantics = [#tpu.dimension_semantics<arbitrary>], iteration_bounds = array<i64: 1>, scalar_prefetch = 0 : i64, scratch_operands = 2 : i64, tpu.core_type = #tpu.core_type<tc>, window_params = [{pipeline_mode = #tpu.pipeline_mode<synchronous>, transform_indices = @transform_0, window_bounds = array<i64: 64, 32>}, {pipeline_mode = #tpu.pipeline_mode<synchronous>, transform_indices = @transform_1, window_bounds = array<i64: 32, 512>}, {pipeline_mode = #tpu.pipeline_mode<synchronous>, transform_indices = @transform_2, window_bounds = array<i64: 128, 512>}, {pipeline_mode = #tpu.pipeline_mode<synchronous>, transform_indices = @transform_3, window_bounds = array<i64: 1, 512>}, {transform_indices = @transform_4, window_bounds = array<i64: 128, 128>}, {transform_indices = @transform_5, window_bounds = array<i64: 1, 128>}, {transform_indices = @transform_6, window_bounds = array<i64: 64, 128>}]} {
    %c0_i32 = arith.constant 0 : i32
    %0 = arith.cmpi eq, %arg0, %c0_i32 : i32
    %1 = arith.extui %0 : i1 to i32
    %c0_i32_0 = arith.constant 0 : i32
    %2 = arith.cmpi ne, %1, %c0_i32_0 : i32
    scf.if %2 {
      %c0_8 = arith.constant 0 : index
      %c0_9 = arith.constant 0 : index
      %10 = vector.load %arg1[%c0_8, %c0_9] : memref<64x32xf32, #tpu.memory_space<vmem>>, vector<64x32xf32>
      %c0_10 = arith.constant 0 : index
      %c0_11 = arith.constant 0 : index
      %11 = vector.load %arg2[%c0_10, %c0_11] : memref<32x512xf32, #tpu.memory_space<vmem>>, vector<32x512xf32>
      %cst_12 = arith.constant dense<0.000000e+00> : vector<64x512xf32>
      %12 = tpu.matmul %10, %11, %cst_12 {dimension_numbers = #tpu.dot_dimension_numbers<[1], [0], [0], [1], [0, 0, 1, 1], [], []>} : vector<64x32xf32>, vector<32x512xf32>, vector<64x512xf32> -> vector<64x512xf32>
      %c0_13 = arith.constant 0 : index
      %c0_14 = arith.constant 0 : index
      %13 = vector.load %arg4[%c0_13, %c0_14] : memref<1x512xf32, #tpu.memory_space<vmem>>, vector<1x512xf32>
      %14 = vector.broadcast %13 : vector<1x512xf32> to vector<64x512xf32>
      %15 = arith.addf %12, %14 : vector<64x512xf32>
      %c0_15 = arith.constant 0 : index
      %c0_16 = arith.constant 0 : index
      %16 = vector.load %arg8[%c0_15, %c0_16] : memref<64x512xf32, #tpu.memory_space<vmem>>, vector<64x512xf32>
      tpu.vector_store %arg8[%c0_15, %c0_16], %15 {strides = array<i32>} : memref<64x512xf32, #tpu.memory_space<vmem>>, vector<64x512xf32>,
      %cst_17 = arith.constant 0.000000e+00 : f32
      %17 = vector.broadcast %cst_17 : f32 to vector<8x128xf32>
      %cst_18 = arith.constant 0.000000e+00 : f32
      %18 = vector.broadcast %cst_18 : f32 to vector<8x128xf32>
      %c0_i32_19 = arith.constant 0 : i32
      %c8_i32 = arith.constant 8 : i32
      %19 = arith.muli %c0_i32_19, %c8_i32 : i32
      %20 = tpu.assume_multiple %19, 8 : i32
      %21 = arith.index_cast %20 : i32 to index
      %c0_20 = arith.constant 0 : index
      %22 = vector.load %arg8[%21, %c0_20] : memref<64x512xf32, #tpu.memory_space<vmem>>, vector<8x512xf32>
      %c0_21 = arith.constant 0 : index
      %c0_22 = arith.constant 0 : index
      %23 = vector.load %arg3[%c0_21, %c0_22] : memref<128x512xf32, #tpu.memory_space<vmem>>, vector<128x512xf32>
      %cst_23 = arith.constant dense<0.000000e+00> : vector<8x512xf32>
      %24 = tpu.matmul %17, %23, %cst_23 {dimension_numbers = #tpu.dot_dimension_numbers<[1], [0], [0], [1], [0, 0, 1, 1], [], []>} : vector<8x128xf32>, vector<128x512xf32>, vector<8x512xf32> -> vector<8x512xf32>
      %25 = arith.addf %22, %24 : vector<8x512xf32>
      %26 = vector.extract_strided_slice %25 {offsets = [0, 0], sizes = [8, 384], strides = [1, 1]} : vector<8x512xf32> to vector<8x384xf32>
      %27 = arith.negf %26 : vector<8x384xf32>
      %28 = math.exp %27 : vector<8x384xf32>
      %cst_24 = arith.constant 1.000000e+00 : f32
      %29 = vector.broadcast %cst_24 : f32 to vector<8x384xf32>
      %30 = arith.addf %29, %28 : vector<8x384xf32>
      %31 = arith.divf %29, %30 : vector<8x384xf32>
      %32 = vector.extract_strided_slice %25 {offsets = [0, 384], sizes = [8, 128], strides = [1, 1]} : vector<8x512xf32> to vector<8x128xf32>
      %33 = math.tanh %32 : vector<8x128xf32>
      %34 = vector.extract_strided_slice %31 {offsets = [0, 0], sizes = [8, 128], strides = [1, 1]} : vector<8x384xf32> to vector<8x128xf32>
      %35 = vector.extract_strided_slice %31 {offsets = [0, 128], sizes = [8, 128], strides = [1, 1]} : vector<8x384xf32> to vector<8x128xf32>
      %36 = vector.extract_strided_slice %31 {offsets = [0, 256], sizes = [8, 128], strides = [1, 1]} : vector<8x384xf32> to vector<8x128xf32>
      %37 = arith.mulf %35, %18 : vector<8x128xf32>
      %38 = arith.mulf %34, %33 : vector<8x128xf32>
      %39 = arith.addf %37, %38 : vector<8x128xf32>
      %40 = math.tanh %39 : vector<8x128xf32>
      %41 = arith.mulf %36, %40 : vector<8x128xf32>
      %42 = arith.index_cast %20 : i32 to index
      %c0_25 = arith.constant 0 : index
      %43 = vector.load %arg9[%42, %c0_25] : memref<64x128xf32, #tpu.memory_space<vmem>>, vector<8x128xf32>
      tpu.vector_store %arg9[%42, %c0_25], %41 {strides = array<i32>} : memref<64x128xf32, #tpu.memory_space<vmem>>, vector<8x128xf32>,
      %c1_i32 = arith.constant 1 : i32
      %c8_i32_26 = arith.constant 8 : i32
      %44 = arith.muli %c1_i32, %c8_i32_26 : i32
      %45 = tpu.assume_multiple %44, 8 : i32
      %46 = arith.index_cast %45 : i32 to index
      %c0_27 = arith.constant 0 : index
      %47 = vector.load %arg8[%46, %c0_27] : memref<64x512xf32, #tpu.memory_space<vmem>>, vector<8x512xf32>
      %c0_28 = arith.constant 0 : index
      %c0_29 = arith.constant 0 : index
      %48 = vector.load %arg3[%c0_28, %c0_29] : memref<128x512xf32, #tpu.memory_space<vmem>>, vector<128x512xf32>
      %cst_30 = arith.constant dense<0.000000e+00> : vector<8x512xf32>
      %49 = tpu.matmul %41, %48, %cst_30 {dimension_numbers = #tpu.dot_dimension_numbers<[1], [0], [0], [1], [0, 0, 1, 1], [], []>} : vector<8x128xf32>, vector<128x512xf32>, vector<8x512xf32> -> vector<8x512xf32>
      %50 = arith.addf %47, %49 : vector<8x512xf32>
      %51 = vector.extract_strided_slice %50 {offsets = [0, 0], sizes = [8, 384], strides = [1, 1]} : vector<8x512xf32> to vector<8x384xf32>
      %52 = arith.negf %51 : vector<8x384xf32>
      %53 = math.exp %52 : vector<8x384xf32>
      %cst_31 = arith.constant 1.000000e+00 : f32
      %54 = vector.broadcast %cst_31 : f32 to vector<8x384xf32>
      %55 = arith.addf %54, %53 : vector<8x384xf32>
      %56 = arith.divf %54, %55 : vector<8x384xf32>
      %57 = vector.extract_strided_slice %50 {offsets = [0, 384], sizes = [8, 128], strides = [1, 1]} : vector<8x512xf32> to vector<8x128xf32>
      %58 = math.tanh %57 : vector<8x128xf32>
      %59 = vector.extract_strided_slice %56 {offsets = [0, 0], sizes = [8, 128], strides = [1, 1]} : vector<8x384xf32> to vector<8x128xf32>
      %60 = vector.extract_strided_slice %56 {offsets = [0, 128], sizes = [8, 128], strides = [1, 1]} : vector<8x384xf32> to vector<8x128xf32>
      %61 = vector.extract_strided_slice %56 {offsets = [0, 256], sizes = [8, 128], strides = [1, 1]} : vector<8x384xf32> to vector<8x128xf32>
      %62 = arith.mulf %60, %39 : vector<8x128xf32>
      %63 = arith.mulf %59, %58 : vector<8x128xf32>
      %64 = arith.addf %62, %63 : vector<8x128xf32>
      %65 = math.tanh %64 : vector<8x128xf32>
      %66 = arith.mulf %61, %65 : vector<8x128xf32>
      %67 = arith.index_cast %45 : i32 to index
      %c0_32 = arith.constant 0 : index
      %68 = vector.load %arg9[%67, %c0_32] : memref<64x128xf32, #tpu.memory_space<vmem>>, vector<8x128xf32>
      tpu.vector_store %arg9[%67, %c0_32], %66 {strides = array<i32>} : memref<64x128xf32, #tpu.memory_space<vmem>>, vector<8x128xf32>,
      %c2_i32 = arith.constant 2 : i32
      %c8_i32_33 = arith.constant 8 : i32
      %69 = arith.muli %c2_i32, %c8_i32_33 : i32
      %70 = tpu.assume_multiple %69, 8 : i32
      %71 = arith.index_cast %70 : i32 to index
      %c0_34 = arith.constant 0 : index
      %72 = vector.load %arg8[%71, %c0_34] : memref<64x512xf32, #tpu.memory_space<vmem>>, vector<8x512xf32>
      %c0_35 = arith.constant 0 : index
      %c0_36 = arith.constant 0 : index
      %73 = vector.load %arg3[%c0_35, %c0_36] : memref<128x512xf32, #tpu.memory_space<vmem>>, vector<128x512xf32>
      %cst_37 = arith.constant dense<0.000000e+00> : vector<8x512xf32>
      %74 = tpu.matmul %66, %73, %cst_37 {dimension_numbers = #tpu.dot_dimension_numbers<[1], [0], [0], [1], [0, 0, 1, 1], [], []>} : vector<8x128xf32>, vector<128x512xf32>, vector<8x512xf32> -> vector<8x512xf32>
      %75 = arith.addf %72, %74 : vector<8x512xf32>
      %76 = vector.extract_strided_slice %75 {offsets = [0, 0], sizes = [8, 384], strides = [1, 1]} : vector<8x512xf32> to vector<8x384xf32>
      %77 = arith.negf %76 : vector<8x384xf32>
      %78 = math.exp %77 : vector<8x384xf32>
      %cst_38 = arith.constant 1.000000e+00 : f32
      %79 = vector.broadcast %cst_38 : f32 to vector<8x384xf32>
      %80 = arith.addf %79, %78 : vector<8x384xf32>
      %81 = arith.divf %79, %80 : vector<8x384xf32>
      %82 = vector.extract_strided_slice %75 {offsets = [0, 384], sizes = [8, 128], strides = [1, 1]} : vector<8x512xf32> to vector<8x128xf32>
      %83 = math.tanh %82 : vector<8x128xf32>
      %84 = vector.extract_strided_slice %81 {offsets = [0, 0], sizes = [8, 128], strides = [1, 1]} : vector<8x384xf32> to vector<8x128xf32>
      %85 = vector.extract_strided_slice %81 {offsets = [0, 128], sizes = [8, 128], strides = [1, 1]} : vector<8x384xf32> to vector<8x128xf32>
      %86 = vector.extract_strided_slice %81 {offsets = [0, 256], sizes = [8, 128], strides = [1, 1]} : vector<8x384xf32> to vector<8x128xf32>
      %87 = arith.mulf %85, %64 : vector<8x128xf32>
      %88 = arith.mulf %84, %83 : vector<8x128xf32>
      %89 = arith.addf %87, %88 : vector<8x128xf32>
      %90 = math.tanh %89 : vector<8x128xf32>
      %91 = arith.mulf %86, %90 : vector<8x128xf32>
      %92 = arith.index_cast %70 : i32 to index
      %c0_39 = arith.constant 0 : index
      %93 = vector.load %arg9[%92, %c0_39] : memref<64x128xf32, #tpu.memory_space<vmem>>, vector<8x128xf32>
      tpu.vector_store %arg9[%92, %c0_39], %91 {strides = array<i32>} : memref<64x128xf32, #tpu.memory_space<vmem>>, vector<8x128xf32>,
      %c3_i32 = arith.constant 3 : i32
      %c8_i32_40 = arith.constant 8 : i32
      %94 = arith.muli %c3_i32, %c8_i32_40 : i32
      %95 = tpu.assume_multiple %94, 8 : i32
      %96 = arith.index_cast %95 : i32 to index
      %c0_41 = arith.constant 0 : index
      %97 = vector.load %arg8[%96, %c0_41] : memref<64x512xf32, #tpu.memory_space<vmem>>, vector<8x512xf32>
      %c0_42 = arith.constant 0 : index
      %c0_43 = arith.constant 0 : index
      %98 = vector.load %arg3[%c0_42, %c0_43] : memref<128x512xf32, #tpu.memory_space<vmem>>, vector<128x512xf32>
      %cst_44 = arith.constant dense<0.000000e+00> : vector<8x512xf32>
      %99 = tpu.matmul %91, %98, %cst_44 {dimension_numbers = #tpu.dot_dimension_numbers<[1], [0], [0], [1], [0, 0, 1, 1], [], []>} : vector<8x128xf32>, vector<128x512xf32>, vector<8x512xf32> -> vector<8x512xf32>
      %100 = arith.addf %97, %99 : vector<8x512xf32>
      %101 = vector.extract_strided_slice %100 {offsets = [0, 0], sizes = [8, 384], strides = [1, 1]} : vector<8x512xf32> to vector<8x384xf32>
      %102 = arith.negf %101 : vector<8x384xf32>
      %103 = math.exp %102 : vector<8x384xf32>
      %cst_45 = arith.constant 1.000000e+00 : f32
      %104 = vector.broadcast %cst_45 : f32 to vector<8x384xf32>
      %105 = arith.addf %104, %103 : vector<8x384xf32>
      %106 = arith.divf %104, %105 : vector<8x384xf32>
      %107 = vector.extract_strided_slice %100 {offsets = [0, 384], sizes = [8, 128], strides = [1, 1]} : vector<8x512xf32> to vector<8x128xf32>
      %108 = math.tanh %107 : vector<8x128xf32>
      %109 = vector.extract_strided_slice %106 {offsets = [0, 0], sizes = [8, 128], strides = [1, 1]} : vector<8x384xf32> to vector<8x128xf32>
      %110 = vector.extract_strided_slice %106 {offsets = [0, 128], sizes = [8, 128], strides = [1, 1]} : vector<8x384xf32> to vector<8x128xf32>
      %111 = vector.extract_strided_slice %106 {offsets = [0, 256], sizes = [8, 128], strides = [1, 1]} : vector<8x384xf32> to vector<8x128xf32>
      %112 = arith.mulf %110, %89 : vector<8x128xf32>
      %113 = arith.mulf %109, %108 : vector<8x128xf32>
      %114 = arith.addf %112, %113 : vector<8x128xf32>
      %115 = math.tanh %114 : vector<8x128xf32>
      %116 = arith.mulf %111, %115 : vector<8x128xf32>
      %117 = arith.index_cast %95 : i32 to index
      %c0_46 = arith.constant 0 : index
      %118 = vector.load %arg9[%117, %c0_46] : memref<64x128xf32, #tpu.memory_space<vmem>>, vector<8x128xf32>
      tpu.vector_store %arg9[%117, %c0_46], %116 {strides = array<i32>} : memref<64x128xf32, #tpu.memory_space<vmem>>, vector<8x128xf32>,
      %c4_i32 = arith.constant 4 : i32
      %c8_i32_47 = arith.constant 8 : i32
      %119 = arith.muli %c4_i32, %c8_i32_47 : i32
      %120 = tpu.assume_multiple %119, 8 : i32
      %121 = arith.index_cast %120 : i32 to index
      %c0_48 = arith.constant 0 : index
      %122 = vector.load %arg8[%121, %c0_48] : memref<64x512xf32, #tpu.memory_space<vmem>>, vector<8x512xf32>
      %c0_49 = arith.constant 0 : index
      %c0_50 = arith.constant 0 : index
      %123 = vector.load %arg3[%c0_49, %c0_50] : memref<128x512xf32, #tpu.memory_space<vmem>>, vector<128x512xf32>
      %cst_51 = arith.constant dense<0.000000e+00> : vector<8x512xf32>
      %124 = tpu.matmul %116, %123, %cst_51 {dimension_numbers = #tpu.dot_dimension_numbers<[1], [0], [0], [1], [0, 0, 1, 1], [], []>} : vector<8x128xf32>, vector<128x512xf32>, vector<8x512xf32> -> vector<8x512xf32>
      %125 = arith.addf %122, %124 : vector<8x512xf32>
      %126 = vector.extract_strided_slice %125 {offsets = [0, 0], sizes = [8, 384], strides = [1, 1]} : vector<8x512xf32> to vector<8x384xf32>
      %127 = arith.negf %126 : vector<8x384xf32>
      %128 = math.exp %127 : vector<8x384xf32>
      %cst_52 = arith.constant 1.000000e+00 : f32
      %129 = vector.broadcast %cst_52 : f32 to vector<8x384xf32>
      %130 = arith.addf %129, %128 : vector<8x384xf32>
      %131 = arith.divf %129, %130 : vector<8x384xf32>
      %132 = vector.extract_strided_slice %125 {offsets = [0, 384], sizes = [8, 128], strides = [1, 1]} : vector<8x512xf32> to vector<8x128xf32>
      %133 = math.tanh %132 : vector<8x128xf32>
      %134 = vector.extract_strided_slice %131 {offsets = [0, 0], sizes = [8, 128], strides = [1, 1]} : vector<8x384xf32> to vector<8x128xf32>
      %135 = vector.extract_strided_slice %131 {offsets = [0, 128], sizes = [8, 128], strides = [1, 1]} : vector<8x384xf32> to vector<8x128xf32>
      %136 = vector.extract_strided_slice %131 {offsets = [0, 256], sizes = [8, 128], strides = [1, 1]} : vector<8x384xf32> to vector<8x128xf32>
      %137 = arith.mulf %135, %114 : vector<8x128xf32>
      %138 = arith.mulf %134, %133 : vector<8x128xf32>
      %139 = arith.addf %137, %138 : vector<8x128xf32>
      %140 = math.tanh %139 : vector<8x128xf32>
      %141 = arith.mulf %136, %140 : vector<8x128xf32>
      %142 = arith.index_cast %120 : i32 to index
      %c0_53 = arith.constant 0 : index
      %143 = vector.load %arg9[%142, %c0_53] : memref<64x128xf32, #tpu.memory_space<vmem>>, vector<8x128xf32>
      tpu.vector_store %arg9[%142, %c0_53], %141 {strides = array<i32>} : memref<64x128xf32, #tpu.memory_space<vmem>>, vector<8x128xf32>,
      %c5_i32 = arith.constant 5 : i32
      %c8_i32_54 = arith.constant 8 : i32
      %144 = arith.muli %c5_i32, %c8_i32_54 : i32
      %145 = tpu.assume_multiple %144, 8 : i32
      %146 = arith.index_cast %145 : i32 to index
      %c0_55 = arith.constant 0 : index
      %147 = vector.load %arg8[%146, %c0_55] : memref<64x512xf32, #tpu.memory_space<vmem>>, vector<8x512xf32>
      %c0_56 = arith.constant 0 : index
      %c0_57 = arith.constant 0 : index
      %148 = vector.load %arg3[%c0_56, %c0_57] : memref<128x512xf32, #tpu.memory_space<vmem>>, vector<128x512xf32>
      %cst_58 = arith.constant dense<0.000000e+00> : vector<8x512xf32>
      %149 = tpu.matmul %141, %148, %cst_58 {dimension_numbers = #tpu.dot_dimension_numbers<[1], [0], [0], [1], [0, 0, 1, 1], [], []>} : vector<8x128xf32>, vector<128x512xf32>, vector<8x512xf32> -> vector<8x512xf32>
      %150 = arith.addf %147, %149 : vector<8x512xf32>
      %151 = vector.extract_strided_slice %150 {offsets = [0, 0], sizes = [8, 384], strides = [1, 1]} : vector<8x512xf32> to vector<8x384xf32>
      %152 = arith.negf %151 : vector<8x384xf32>
      %153 = math.exp %152 : vector<8x384xf32>
      %cst_59 = arith.constant 1.000000e+00 : f32
      %154 = vector.broadcast %cst_59 : f32 to vector<8x384xf32>
      %155 = arith.addf %154, %153 : vector<8x384xf32>
      %156 = arith.divf %154, %155 : vector<8x384xf32>
      %157 = vector.extract_strided_slice %150 {offsets = [0, 384], sizes = [8, 128], strides = [1, 1]} : vector<8x512xf32> to vector<8x128xf32>
      %158 = math.tanh %157 : vector<8x128xf32>
      %159 = vector.extract_strided_slice %156 {offsets = [0, 0], sizes = [8, 128], strides = [1, 1]} : vector<8x384xf32> to vector<8x128xf32>
      %160 = vector.extract_strided_slice %156 {offsets = [0, 128], sizes = [8, 128], strides = [1, 1]} : vector<8x384xf32> to vector<8x128xf32>
      %161 = vector.extract_strided_slice %156 {offsets = [0, 256], sizes = [8, 128], strides = [1, 1]} : vector<8x384xf32> to vector<8x128xf32>
      %162 = arith.mulf %160, %139 : vector<8x128xf32>
      %163 = arith.mulf %159, %158 : vector<8x128xf32>
      %164 = arith.addf %162, %163 : vector<8x128xf32>
      %165 = math.tanh %164 : vector<8x128xf32>
      %166 = arith.mulf %161, %165 : vector<8x128xf32>
      %167 = arith.index_cast %145 : i32 to index
      %c0_60 = arith.constant 0 : index
      %168 = vector.load %arg9[%167, %c0_60] : memref<64x128xf32, #tpu.memory_space<vmem>>, vector<8x128xf32>
      tpu.vector_store %arg9[%167, %c0_60], %166 {strides = array<i32>} : memref<64x128xf32, #tpu.memory_space<vmem>>, vector<8x128xf32>,
      %c6_i32 = arith.constant 6 : i32
      %c8_i32_61 = arith.constant 8 : i32
      %169 = arith.muli %c6_i32, %c8_i32_61 : i32
      %170 = tpu.assume_multiple %169, 8 : i32
      %171 = arith.index_cast %170 : i32 to index
      %c0_62 = arith.constant 0 : index
      %172 = vector.load %arg8[%171, %c0_62] : memref<64x512xf32, #tpu.memory_space<vmem>>, vector<8x512xf32>
      %c0_63 = arith.constant 0 : index
      %c0_64 = arith.constant 0 : index
      %173 = vector.load %arg3[%c0_63, %c0_64] : memref<128x512xf32, #tpu.memory_space<vmem>>, vector<128x512xf32>
      %cst_65 = arith.constant dense<0.000000e+00> : vector<8x512xf32>
      %174 = tpu.matmul %166, %173, %cst_65 {dimension_numbers = #tpu.dot_dimension_numbers<[1], [0], [0], [1], [0, 0, 1, 1], [], []>} : vector<8x128xf32>, vector<128x512xf32>, vector<8x512xf32> -> vector<8x512xf32>
      %175 = arith.addf %172, %174 : vector<8x512xf32>
      %176 = vector.extract_strided_slice %175 {offsets = [0, 0], sizes = [8, 384], strides = [1, 1]} : vector<8x512xf32> to vector<8x384xf32>
      %177 = arith.negf %176 : vector<8x384xf32>
      %178 = math.exp %177 : vector<8x384xf32>
      %cst_66 = arith.constant 1.000000e+00 : f32
      %179 = vector.broadcast %cst_66 : f32 to vector<8x384xf32>
      %180 = arith.addf %179, %178 : vector<8x384xf32>
      %181 = arith.divf %179, %180 : vector<8x384xf32>
      %182 = vector.extract_strided_slice %175 {offsets = [0, 384], sizes = [8, 128], strides = [1, 1]} : vector<8x512xf32> to vector<8x128xf32>
      %183 = math.tanh %182 : vector<8x128xf32>
      %184 = vector.extract_strided_slice %181 {offsets = [0, 0], sizes = [8, 128], strides = [1, 1]} : vector<8x384xf32> to vector<8x128xf32>
      %185 = vector.extract_strided_slice %181 {offsets = [0, 128], sizes = [8, 128], strides = [1, 1]} : vector<8x384xf32> to vector<8x128xf32>
      %186 = vector.extract_strided_slice %181 {offsets = [0, 256], sizes = [8, 128], strides = [1, 1]} : vector<8x384xf32> to vector<8x128xf32>
      %187 = arith.mulf %185, %164 : vector<8x128xf32>
      %188 = arith.mulf %184, %183 : vector<8x128xf32>
      %189 = arith.addf %187, %188 : vector<8x128xf32>
      %190 = math.tanh %189 : vector<8x128xf32>
      %191 = arith.mulf %186, %190 : vector<8x128xf32>
      %192 = arith.index_cast %170 : i32 to index
      %c0_67 = arith.constant 0 : index
      %193 = vector.load %arg9[%192, %c0_67] : memref<64x128xf32, #tpu.memory_space<vmem>>, vector<8x128xf32>
      tpu.vector_store %arg9[%192, %c0_67], %191 {strides = array<i32>} : memref<64x128xf32, #tpu.memory_space<vmem>>, vector<8x128xf32>,
      %c7_i32 = arith.constant 7 : i32
      %c8_i32_68 = arith.constant 8 : i32
      %194 = arith.muli %c7_i32, %c8_i32_68 : i32
      %195 = tpu.assume_multiple %194, 8 : i32
      %196 = arith.index_cast %195 : i32 to index
      %c0_69 = arith.constant 0 : index
      %197 = vector.load %arg8[%196, %c0_69] : memref<64x512xf32, #tpu.memory_space<vmem>>, vector<8x512xf32>
      %c0_70 = arith.constant 0 : index
      %c0_71 = arith.constant 0 : index
      %198 = vector.load %arg3[%c0_70, %c0_71] : memref<128x512xf32, #tpu.memory_space<vmem>>, vector<128x512xf32>
      %cst_72 = arith.constant dense<0.000000e+00> : vector<8x512xf32>
      %199 = tpu.matmul %191, %198, %cst_72 {dimension_numbers = #tpu.dot_dimension_numbers<[1], [0], [0], [1], [0, 0, 1, 1], [], []>} : vector<8x128xf32>, vector<128x512xf32>, vector<8x512xf32> -> vector<8x512xf32>
      %200 = arith.addf %197, %199 : vector<8x512xf32>
      %201 = vector.extract_strided_slice %200 {offsets = [0, 0], sizes = [8, 384], strides = [1, 1]} : vector<8x512xf32> to vector<8x384xf32>
      %202 = arith.negf %201 : vector<8x384xf32>
      %203 = math.exp %202 : vector<8x384xf32>
      %cst_73 = arith.constant 1.000000e+00 : f32
      %204 = vector.broadcast %cst_73 : f32 to vector<8x384xf32>
      %205 = arith.addf %204, %203 : vector<8x384xf32>
      %206 = arith.divf %204, %205 : vector<8x384xf32>
      %207 = vector.extract_strided_slice %200 {offsets = [0, 384], sizes = [8, 128], strides = [1, 1]} : vector<8x512xf32> to vector<8x128xf32>
      %208 = math.tanh %207 : vector<8x128xf32>
      %209 = vector.extract_strided_slice %206 {offsets = [0, 0], sizes = [8, 128], strides = [1, 1]} : vector<8x384xf32> to vector<8x128xf32>
      %210 = vector.extract_strided_slice %206 {offsets = [0, 128], sizes = [8, 128], strides = [1, 1]} : vector<8x384xf32> to vector<8x128xf32>
      %211 = vector.extract_strided_slice %206 {offsets = [0, 256], sizes = [8, 128], strides = [1, 1]} : vector<8x384xf32> to vector<8x128xf32>
      %212 = arith.mulf %210, %189 : vector<8x128xf32>
      %213 = arith.mulf %209, %208 : vector<8x128xf32>
      %214 = arith.addf %212, %213 : vector<8x128xf32>
      %215 = math.tanh %214 : vector<8x128xf32>
      %216 = arith.mulf %211, %215 : vector<8x128xf32>
      %217 = arith.index_cast %195 : i32 to index
      %c0_74 = arith.constant 0 : index
      %218 = vector.load %arg9[%217, %c0_74] : memref<64x128xf32, #tpu.memory_space<vmem>>, vector<8x128xf32>
      tpu.vector_store %arg9[%217, %c0_74], %216 {strides = array<i32>} : memref<64x128xf32, #tpu.memory_space<vmem>>, vector<8x128xf32>,
      %c8_i32_75 = arith.constant 8 : i32
    } else {
    }
    %c0 = arith.constant 0 : index
    %c0_1 = arith.constant 0 : index
    %3 = vector.load %arg9[%c0, %c0_1] : memref<64x128xf32, #tpu.memory_space<vmem>>, vector<64x128xf32>
    %c0_2 = arith.constant 0 : index
    %c0_3 = arith.constant 0 : index
    %4 = vector.load %arg5[%c0_2, %c0_3] : memref<128x128xf32, #tpu.memory_space<vmem>>, vector<128x128xf32>
    %cst = arith.constant dense<0.000000e+00> : vector<64x128xf32>
    %5 = tpu.matmul %3, %4, %cst {dimension_numbers = #tpu.dot_dimension_numbers<[1], [0], [0], [1], [0, 0, 1, 1], [], []>} : vector<64x128xf32>, vector<128x128xf32>, vector<64x128xf32> -> vector<64x128xf32>
    %c0_4 = arith.constant 0 : index
    %c0_5 = arith.constant 0 : index
    %6 = vector.load %arg6[%c0_4, %c0_5] : memref<1x128xf32, #tpu.memory_space<vmem>>, vector<1x128xf32>
    %7 = vector.broadcast %6 : vector<1x128xf32> to vector<64x128xf32>
    %8 = arith.addf %5, %7 : vector<64x128xf32>
    %c0_6 = arith.constant 0 : index
    %c0_7 = arith.constant 0 : index
    %9 = vector.load %arg7[%c0_6, %c0_7] : memref<64x128xf32, #tpu.memory_space<vmem>>, vector<64x128xf32>
    tpu.vector_store %arg7[%c0_6, %c0_7], %8 {strides = array<i32>} : memref<64x128xf32, #tpu.memory_space<vmem>>, vector<64x128xf32>,
    return
  }
  func.func @transform_0(%arg0: i32) -> (i32, i32) {
    %c0_i32 = arith.constant 0 : i32
    %c0_i32_0 = arith.constant 0 : i32
    %c0_i32_1 = arith.constant 0 : i32
    return %c0_i32, %c0_i32_0 : i32, i32
  }
  func.func @transform_1(%arg0: i32) -> (i32, i32) {
    %c0_i32 = arith.constant 0 : i32
    %c0_i32_0 = arith.constant 0 : i32
    %c0_i32_1 = arith.constant 0 : i32
    return %c0_i32, %c0_i32_0 : i32, i32
  }
  func.func @transform_2(%arg0: i32) -> (i32, i32) {
    %c0_i32 = arith.constant 0 : i32
    %c0_i32_0 = arith.constant 0 : i32
    %c0_i32_1 = arith.constant 0 : i32
    return %c0_i32, %c0_i32_0 : i32, i32
  }
  func.func @transform_3(%arg0: i32) -> (i32, i32) {
    %c0_i32 = arith.constant 0 : i32
    %c0_i32_0 = arith.constant 0 : i32
    %c0_i32_1 = arith.constant 0 : i32
    return %c0_i32, %c0_i32_0 : i32, i32
  }
  func.func @transform_4(%arg0: i32) -> (i32, i32) {
    %c0_i32 = arith.constant 0 : i32
    %c0_i32_0 = arith.constant 0 : i32
    return %c0_i32, %arg0 : i32, i32
  }
  func.func @transform_5(%arg0: i32) -> (i32, i32) {
    %c0_i32 = arith.constant 0 : i32
    %c0_i32_0 = arith.constant 0 : i32
    return %c0_i32, %arg0 : i32, i32
  }
  func.func @transform_6(%arg0: i32) -> (i32, i32) {
    %c0_i32 = arith.constant 0 : i32
    %c0_i32_0 = arith.constant 0 : i32
    return %c0_i32, %arg0 : i32, i32
  }
}

</mosaic_0001>

<llo_original>
// kernel: tpu_custom_call.1
$region0: #{tpu_custom_call.1}
  #allocation0 [shape = 'u32[]', space=smem, size = 0x4, offset = 0x4, fixed_abs, tag = 'smem constant byte address 0x4 - core index']
  #allocation1 [shape = 'u32[72,128]{1,0:T(1,128)}', space=vmem, size = 0x9000, scoped, tag = 'internal scratch']
  #allocation2 [shape = 'f32[64,512]{1,0:T(8,128)}', space=vmem, size = 0x20000, scoped, tag = 'scratch operand']
  #allocation3 [shape = 'f32[64,128]{1,0:T(8,128)}', space=vmem, size = 0x8000, scoped, tag = 'scratch operand']
  %s0 = inlined_call_operand.vmem [shape: f32[64,32], index: 0, kind: input, shape index: {}]
  %s1 = inlined_call_operand.hbm [shape: f32[32,512], index: 1, kind: input, shape index: {}]
  %s2 = inlined_call_operand.hbm [shape: f32[128,512], index: 2, kind: input, shape index: {}]
  %s3 = inlined_call_operand.vmem [shape: f32[1,512], index: 3, kind: input, shape index: {}]
  %s4 = inlined_call_operand.hbm [shape: f32[128,128], index: 4, kind: input, shape index: {}]
  %s5 = inlined_call_operand.vmem [shape: f32[1,128], index: 5, kind: input, shape index: {}]
  %s6 = inlined_call_operand.hbm [shape: f32[64,128], index: 6, kind: output, shape index: {}]
  %s7 = sld [smem:[#allocation0]]
  $region50: #{tpu_custom_call.1} parent=0
    _
  %s9 = ssub.s32 1, %s7
  %s10 = scalar_select 0, %s9, %s7
  $region1: #{tpu_custom_call.1} parent=0
    #allocation4 [shape = 'u8[65536]{0}', space=vmem, size = 0x10000, scoped, tag = 'input window, operand 1, single buffered']
    #allocation5 [shape = 's32[1]{0}', space=sflag, size = 0x4, scoped, tag = 'scoped memory for tpu_custom_call.1']
    #allocation6 [shape = 's32[1]{0}', space=sflag, size = 0x4, scoped, tag = 'scoped memory for tpu_custom_call.1']
    #allocation7 [shape = 'u8[262144]{0}', space=vmem, size = 0x40000, scoped, tag = 'input window, operand 2, single buffered']
    #allocation8 [shape = 's32[1]{0}', space=sflag, size = 0x4, scoped, tag = 'scoped memory for tpu_custom_call.1']
    #allocation9 [shape = 'u8[65536]{0}', space=vmem, size = 0x10000, scoped, tag = 'input window, operand 4, single buffered']
    #allocation10 [shape = 'u8[32768]{0}', space=vmem, size = 0x8000, scoped, tag = 'output window, operand 0, single buffered']
    %11 = vsyncpa [#allocation5], 0
    %12 = vsyncpa [#allocation8], 0
    %13 = vsyncpa [#allocation6], 0
    // Predicated region
    $region2: #{tpu_custom_call.1} parent=1 // pred_check
      _
    $region3: #{tpu_custom_call.1} parent=1 // pred_check_branch
      %15 = sbr.rel (0) target = $region5
    $region4: #{tpu_custom_call.1} parent=1 // pred_region
      _
    $region5: #{tpu_custom_call.1} parent=1 // pred_fallthru
      _
    // Predicated region
    $region6: #{tpu_custom_call.1} parent=1 // pred_check
      _
    $region7: #{tpu_custom_call.1} parent=1 // pred_check_branch
      %17 = sbr.rel (0) target = $region9
    $region8: #{tpu_custom_call.1} parent=1 // pred_region
      %19 = vsyncadd [#allocation5], 0
      %s20 = sshll.u32 %s1, 4
      %s21 = int_to_ptr.hbm [resolvable:$true] %s20
      %s22 = sshll.u32 [#allocation4], 4
      %s23 = int_to_ptr.vmem [resolvable:$true] %s22
      %28 = dma.hbm_to_vmem [thread:$0]  %s21, 2048, %s23, [#allocation5], 512, 512, 32
    $region9: #{tpu_custom_call.1} parent=1 // pred_fallthru
      _
    // Predicated region
    $region10: #{tpu_custom_call.1} parent=1 // pred_check
      _
    $region11: #{tpu_custom_call.1} parent=1 // pred_check_branch
      %30 = sbr.rel (0) target = $region13
    $region12: #{tpu_custom_call.1} parent=1 // pred_region
      %32 = vsyncadd [#allocation8], 0
      %s33 = sshll.u32 %s2, 4
      %s34 = int_to_ptr.hbm [resolvable:$true] %s33
      %s35 = sshll.u32 [#allocation7], 4
      %s36 = int_to_ptr.vmem [resolvable:$true] %s35
      %41 = dma.hbm_to_vmem [thread:$0]  %s34, 8192, %s36, [#allocation8], 512, 512, 32
    $region13: #{tpu_custom_call.1} parent=1 // pred_fallthru
      _
    // Predicated region
    $region14: #{tpu_custom_call.1} parent=1 // pred_check
      _
    $region15: #{tpu_custom_call.1} parent=1 // pred_check_branch
      %43 = sbr.rel (0) target = $region17
    $region16: #{tpu_custom_call.1} parent=1 // pred_region
      _
    $region17: #{tpu_custom_call.1} parent=1 // pred_fallthru
      _
    // Predicated region
    $region18: #{tpu_custom_call.1} parent=1 // pred_check
      _
    $region19: #{tpu_custom_call.1} parent=1 // pred_check_branch
      %45 = sbr.rel (0) target = $region21
    $region20: #{tpu_custom_call.1} parent=1 // pred_region
      %47 = vsyncadd [#allocation8], 0
      %s48 = sshll.u32 %s4, 4
      %s49 = int_to_ptr.hbm [resolvable:$true] %s48
      %s50 = sshll.u32 [#allocation9], 4
      %s51 = int_to_ptr.vmem [resolvable:$true] %s50
      %56 = dma.hbm_to_vmem [thread:$0]  %s49, 2048, %s51, [#allocation8], 128, 128, 8
    $region21: #{tpu_custom_call.1} parent=1 // pred_fallthru
      _
    // Predicated region
    $region22: #{tpu_custom_call.1} parent=1 // pred_check
      _
    $region23: #{tpu_custom_call.1} parent=1 // pred_check_branch
      %58 = sbr.rel (0) target = $region25
    $region24: #{tpu_custom_call.1} parent=1 // pred_region
      _
    $region25: #{tpu_custom_call.1} parent=1 // pred_fallthru
      _
    // Predicated region
    $region26: #{tpu_custom_call.1} parent=1 // pred_check
      _
    $region27: #{tpu_custom_call.1} parent=1 // pred_check_branch
      %60 = sbr.rel (0) target = $region29
    $region28: #{tpu_custom_call.1} parent=1 // pred_region
      %62 = dma.done [#allocation5], 2048
    $region29: #{tpu_custom_call.1} parent=1 // pred_fallthru
      _
    // Predicated region
    $region30: #{tpu_custom_call.1} parent=1 // pred_check
      _
    $region31: #{tpu_custom_call.1} parent=1 // pred_check_branch
      %64 = sbr.rel (0) target = $region33
    $region32: #{tpu_custom_call.1} parent=1 // pred_region
      %66 = dma.done [#allocation8], 8192
    $region33: #{tpu_custom_call.1} parent=1 // pred_fallthru
      _
    // Predicated region
    $region34: #{tpu_custom_call.1} parent=1 // pred_check
      _
    $region35: #{tpu_custom_call.1} parent=1 // pred_check_branch
      %68 = sbr.rel (0) target = $region37
    $region36: #{tpu_custom_call.1} parent=1 // pred_region
      %70 = dma.done [#allocation8], 2048
    $region37: #{tpu_custom_call.1} parent=1 // pred_fallthru
      _
    %p71 = scmp.eq.s32.totalorder 0, 0
    // Predicated region
    $region38: #{tpu_custom_call.1} parent=1 // pred_check
      %p72 = pneg %p71
    $region39: #{tpu_custom_call.1} parent=1 // pred_check_branch
      %74 = sbr.rel (%p72) target = $region41
    $region40: #{tpu_custom_call.1} parent=1 // pred_region
      %v75 = vld [vmem:[%s0] sm:$0xff]
      %v76 = vld [vmem:[%s0 + $0x8] sm:$0xff]
      %v77 = vld [vmem:[%s0 + $0x10] sm:$0xff]
      %v78 = vld [vmem:[%s0 + $0x18] sm:$0xff]
      %v79 = vld [vmem:[%s0 + $0x20] sm:$0xff]
      %v80 = vld [vmem:[%s0 + $0x28] sm:$0xff]
      %v81 = vld [vmem:[%s0 + $0x30] sm:$0xff]
      %v82 = vld [vmem:[%s0 + $0x38] sm:$0xff]
      %v83 = vld [vmem:[#allocation4] sm:$0xff]
      %v84 = vld [vmem:[#allocation4 + $0x8] sm:$0xff]
      %v85 = vld [vmem:[#allocation4 + $0x10] sm:$0xff]
      %v86 = vld [vmem:[#allocation4 + $0x18] sm:$0xff]
      %v87 = vld [vmem:[#allocation4 + $0x20] sm:$0xff]
      %v88 = vld [vmem:[#allocation4 + $0x28] sm:$0xff]
      %v89 = vld [vmem:[#allocation4 + $0x30] sm:$0xff]
      %v90 = vld [vmem:[#allocation4 + $0x38] sm:$0xff]
      %v91 = vld [vmem:[#allocation4 + $0x40] sm:$0xff]
      %v92 = vld [vmem:[#allocation4 + $0x48] sm:$0xff]
      %v93 = vld [vmem:[#allocation4 + $0x50] sm:$0xff]
      %v94 = vld [vmem:[#allocation4 + $0x58] sm:$0xff]
      %v95 = vld [vmem:[#allocation4 + $0x60] sm:$0xff]
      %v96 = vld [vmem:[#allocation4 + $0x68] sm:$0xff]
      %v97 = vld [vmem:[#allocation4 + $0x70] sm:$0xff]
      %v98 = vld [vmem:[#allocation4 + $0x78] sm:$0xff]
      %v99 = vld [vmem:[%s3] sm:$0xf]
      %v101 = vperm.slane %v99, 0
      %v102 = vperm.slane %v99, 1
      %v103 = vperm.slane %v99, 2
      %v104 = vperm.slane %v99, 3
      %vm109 = vcmask 261120
      %v111 = vsel %vm109, %v75, 0
      %v114 = vsel %vm109, %v76, 0
      %v117 = vsel %vm109, %v77, 0
      %v120 = vsel %vm109, %v78, 0
      %v123 = vsel %vm109, %v79, 0
      %v126 = vsel %vm109, %v80, 0
      %v129 = vsel %vm109, %v81, 0
      %v132 = vsel %vm109, %v82, 0
      %134 = vmatpush.msra.mxu0 0.0
      %135 = vmatpush.msra.mxu0 0.0
      %136 = vmatpush.msra.mxu0 0.0
      %137 = vmatpush.msra.mxu0 0.0
      %138 = vmatpush.msra.mxu0 0.0
      %139 = vmatpush.msra.mxu0 0.0
      %140 = vmatpush.msra.mxu0 0.0
      %141 = vmatpush.msra.mxu0 0.0
      %142 = vmatpush.msra.mxu0 0.0
      %143 = vmatpush.msra.mxu0 0.0
      %144 = vmatpush.msra.mxu0 0.0
      %145 = vmatpush.msra.mxu0 0.0
      %146 = vmatpush.msra.mxu0 %v95
      %147 = vmatpush.msra.mxu0 %v91
      %148 = vmatpush.msra.mxu0 %v87
      %149 = vmatpush.msra.mxu0 %v83
      %150 = vmatmul.f32.gmra.mxu0 %v111
      %v151 = vpop.f32.mrf.mxu0
      %v152 = vadd.f32 %v101, %v151
      %153 = vmatmul.f32.gmra.mxu0 %v114
      %v154 = vpop.f32.mrf.mxu0
      %v155 = vadd.f32 %v101, %v154
      %156 = vmatmul.f32.gmra.mxu0 %v117
      %v157 = vpop.f32.mrf.mxu0
      %v158 = vadd.f32 %v101, %v157
      %159 = vmatmul.f32.gmra.mxu0 %v120
      %v160 = vpop.f32.mrf.mxu0
      %v161 = vadd.f32 %v101, %v160
      %162 = vmatmul.f32.gmra.mxu0 %v123
      %v163 = vpop.f32.mrf.mxu0
      %v164 = vadd.f32 %v101, %v163
      %165 = vmatmul.f32.gmra.mxu0 %v126
      %v166 = vpop.f32.mrf.mxu0
      %v167 = vadd.f32 %v101, %v166
      %168 = vmatmul.f32.gmra.mxu0 %v129
      %v169 = vpop.f32.mrf.mxu0
      %v170 = vadd.f32 %v101, %v169
      %171 = vmatmul.f32.gmra.mxu0 %v132
      %v172 = vpop.f32.mrf.mxu0
      %v173 = vadd.f32 %v101, %v172
      %174 = vdwg.mxu0
      %175 = vmatpush.msra.mxu0 0.0
      %176 = vmatpush.msra.mxu0 0.0
      %177 = vmatpush.msra.mxu0 0.0
      %178 = vmatpush.msra.mxu0 0.0
      %179 = vmatpush.msra.mxu0 0.0
      %180 = vmatpush.msra.mxu0 0.0
      %181 = vmatpush.msra.mxu0 0.0
      %182 = vmatpush.msra.mxu0 0.0
      %183 = vmatpush.msra.mxu0 0.0
      %184 = vmatpush.msra.mxu0 0.0
      %185 = vmatpush.msra.mxu0 0.0
      %186 = vmatpush.msra.mxu0 0.0
      %187 = vmatpush.msra.mxu0 %v96
      %188 = vmatpush.msra.mxu0 %v92
      %189 = vmatpush.msra.mxu0 %v88
      %190 = vmatpush.msra.mxu0 %v84
      %191 = vmatmul.f32.gmra.mxu0 %v111
      %v192 = vpop.f32.mrf.mxu0
      %v193 = vadd.f32 %v102, %v192
      %194 = vmatmul.f32.gmra.mxu0 %v114
      %v195 = vpop.f32.mrf.mxu0
      %v196 = vadd.f32 %v102, %v195
      %197 = vmatmul.f32.gmra.mxu0 %v117
      %v198 = vpop.f32.mrf.mxu0
      %v199 = vadd.f32 %v102, %v198
      %200 = vmatmul.f32.gmra.mxu0 %v120
      %v201 = vpop.f32.mrf.mxu0
      %v202 = vadd.f32 %v102, %v201
      %203 = vmatmul.f32.gmra.mxu0 %v123
      %v204 = vpop.f32.mrf.mxu0
      %v205 = vadd.f32 %v102, %v204
      %206 = vmatmul.f32.gmra.mxu0 %v126
      %v207 = vpop.f32.mrf.mxu0
      %v208 = vadd.f32 %v102, %v207
      %209 = vmatmul.f32.gmra.mxu0 %v129
      %v210 = vpop.f32.mrf.mxu0
      %v211 = vadd.f32 %v102, %v210
      %212 = vmatmul.f32.gmra.mxu0 %v132
      %v213 = vpop.f32.mrf.mxu0
      %v214 = vadd.f32 %v102, %v213
      %215 = vdwg.mxu0
      %216 = vmatpush.msra.mxu0 0.0
      %217 = vmatpush.msra.mxu0 0.0
      %218 = vmatpush.msra.mxu0 0.0
      %219 = vmatpush.msra.mxu0 0.0
      %220 = vmatpush.msra.mxu0 0.0
      %221 = vmatpush.msra.mxu0 0.0
      %222 = vmatpush.msra.mxu0 0.0
      %223 = vmatpush.msra.mxu0 0.0
      %224 = vmatpush.msra.mxu0 0.0
      %225 = vmatpush.msra.mxu0 0.0
      %226 = vmatpush.msra.mxu0 0.0
      %227 = vmatpush.msra.mxu0 0.0
      %228 = vmatpush.msra.mxu0 %v97
      %229 = vmatpush.msra.mxu0 %v93
      %230 = vmatpush.msra.mxu0 %v89
      %231 = vmatpush.msra.mxu0 %v85
      %232 = vmatmul.f32.gmra.mxu0 %v111
      %v233 = vpop.f32.mrf.mxu0
      %v234 = vadd.f32 %v103, %v233
      %235 = vmatmul.f32.gmra.mxu0 %v114
      %v236 = vpop.f32.mrf.mxu0
      %v237 = vadd.f32 %v103, %v236
      %238 = vmatmul.f32.gmra.mxu0 %v117
      %v239 = vpop.f32.mrf.mxu0
      %v240 = vadd.f32 %v103, %v239
      %241 = vmatmul.f32.gmra.mxu0 %v120
      %v242 = vpop.f32.mrf.mxu0
      %v243 = vadd.f32 %v103, %v242
      %244 = vmatmul.f32.gmra.mxu0 %v123
      %v245 = vpop.f32.mrf.mxu0
      %v246 = vadd.f32 %v103, %v245
      %247 = vmatmul.f32.gmra.mxu0 %v126
      %v248 = vpop.f32.mrf.mxu0
      %v249 = vadd.f32 %v103, %v248
      %250 = vmatmul.f32.gmra.mxu0 %v129
      %v251 = vpop.f32.mrf.mxu0
      %v252 = vadd.f32 %v103, %v251
      %253 = vmatmul.f32.gmra.mxu0 %v132
      %v254 = vpop.f32.mrf.mxu0
      %v255 = vadd.f32 %v103, %v254
      %256 = vdwg.mxu0
      %257 = vmatpush.msra.mxu0 0.0
      %258 = vmatpush.msra.mxu0 0.0
      %259 = vmatpush.msra.mxu0 0.0
      %260 = vmatpush.msra.mxu0 0.0
      %261 = vmatpush.msra.mxu0 0.0
      %262 = vmatpush.msra.mxu0 0.0
      %263 = vmatpush.msra.mxu0 0.0
      %264 = vmatpush.msra.mxu0 0.0
      %265 = vmatpush.msra.mxu0 0.0
      %266 = vmatpush.msra.mxu0 0.0
      %267 = vmatpush.msra.mxu0 0.0
      %268 = vmatpush.msra.mxu0 0.0
      %269 = vmatpush.msra.mxu0 %v98
      %270 = vmatpush.msra.mxu0 %v94
      %271 = vmatpush.msra.mxu0 %v90
      %272 = vmatpush.msra.mxu0 %v86
      %273 = vmatmul.f32.gmra.mxu0 %v111
      %v274 = vpop.f32.mrf.mxu0
      %v275 = vadd.f32 %v104, %v274
      %276 = vmatmul.f32.gmra.mxu0 %v114
      %v277 = vpop.f32.mrf.mxu0
      %v278 = vadd.f32 %v104, %v277
      %279 = vmatmul.f32.gmra.mxu0 %v117
      %v280 = vpop.f32.mrf.mxu0
      %v281 = vadd.f32 %v104, %v280
      %282 = vmatmul.f32.gmra.mxu0 %v120
      %v283 = vpop.f32.mrf.mxu0
      %v284 = vadd.f32 %v104, %v283
      %285 = vmatmul.f32.gmra.mxu0 %v123
      %v286 = vpop.f32.mrf.mxu0
      %v287 = vadd.f32 %v104, %v286
      %288 = vmatmul.f32.gmra.mxu0 %v126
      %v289 = vpop.f32.mrf.mxu0
      %v290 = vadd.f32 %v104, %v289
      %291 = vmatmul.f32.gmra.mxu0 %v129
      %v292 = vpop.f32.mrf.mxu0
      %v293 = vadd.f32 %v104, %v292
      %294 = vmatmul.f32.gmra.mxu0 %v132
      %v295 = vpop.f32.mrf.mxu0
      %v296 = vadd.f32 %v104, %v295
      %297 = vdwg.mxu0
      %298 = vst [vmem:[#allocation2] sm:$0xff] %v152
      %299 = vst [vmem:[#allocation2 + $0x8] sm:$0xff] %v193
      %300 = vst [vmem:[#allocation2 + $0x10] sm:$0xff] %v234
      %301 = vst [vmem:[#allocation2 + $0x18] sm:$0xff] %v275
      %302 = vst [vmem:[#allocation2 + $0x20] sm:$0xff] %v155
      %303 = vst [vmem:[#allocation2 + $0x28] sm:$0xff] %v196
      %304 = vst [vmem:[#allocation2 + $0x30] sm:$0xff] %v237
      %305 = vst [vmem:[#allocation2 + $0x38] sm:$0xff] %v278
      %306 = vst [vmem:[#allocation2 + $0x40] sm:$0xff] %v158
      %307 = vst [vmem:[#allocation2 + $0x48] sm:$0xff] %v199
      %308 = vst [vmem:[#allocation2 + $0x50] sm:$0xff] %v240
      %309 = vst [vmem:[#allocation2 + $0x58] sm:$0xff] %v281
      %310 = vst [vmem:[#allocation2 + $0x60] sm:$0xff] %v161
      %311 = vst [vmem:[#allocation2 + $0x68] sm:$0xff] %v202
      %312 = vst [vmem:[#allocation2 + $0x70] sm:$0xff] %v243
      %313 = vst [vmem:[#allocation2 + $0x78] sm:$0xff] %v284
      %314 = vst [vmem:[#allocation2 + $0x80] sm:$0xff] %v164
      %315 = vst [vmem:[#allocation2 + $0x88] sm:$0xff] %v205
      %316 = vst [vmem:[#allocation2 + $0x90] sm:$0xff] %v246
      %317 = vst [vmem:[#allocation2 + $0x98] sm:$0xff] %v287
      %318 = vst [vmem:[#allocation2 + $0xa0] sm:$0xff] %v167
      %319 = vst [vmem:[#allocation2 + $0xa8] sm:$0xff] %v208
      %320 = vst [vmem:[#allocation2 + $0xb0] sm:$0xff] %v249
      %321 = vst [vmem:[#allocation2 + $0xb8] sm:$0xff] %v290
      %322 = vst [vmem:[#allocation2 + $0xc0] sm:$0xff] %v170
      %323 = vst [vmem:[#allocation2 + $0xc8] sm:$0xff] %v211
      %324 = vst [vmem:[#allocation2 + $0xd0] sm:$0xff] %v252
      %325 = vst [vmem:[#allocation2 + $0xd8] sm:$0xff] %v293
      %326 = vst [vmem:[#allocation2 + $0xe0] sm:$0xff] %v173
      %327 = vst [vmem:[#allocation2 + $0xe8] sm:$0xff] %v214
      %328 = vst [vmem:[#allocation2 + $0xf0] sm:$0xff] %v255
      %329 = vst [vmem:[#allocation2 + $0xf8] sm:$0xff] %v296
      %s330 = smul.u32 0, 4
      %s331 = smul.addr %s330, 8
      %s332 = scalar_lea.vmem [#allocation2], %s331
      %v333 = vld [vmem:[%s332] sm:$0xff]
      %v334 = vld [vmem:[%s332 + $0x8] sm:$0xff]
      %v335 = vld [vmem:[%s332 + $0x10] sm:$0xff]
      %v336 = vld [vmem:[%s332 + $0x18] sm:$0xff]
      %v337 = vld [vmem:[#allocation7] sm:$0xff]
      %v338 = vld [vmem:[#allocation7 + $0x8] sm:$0xff]
      %v339 = vld [vmem:[#allocation7 + $0x10] sm:$0xff]
      %v340 = vld [vmem:[#allocation7 + $0x18] sm:$0xff]
      %v341 = vld [vmem:[#allocation7 + $0x20] sm:$0xff]
      %v342 = vld [vmem:[#allocation7 + $0x28] sm:$0xff]
      %v343 = vld [vmem:[#allocation7 + $0x30] sm:$0xff]
      %v344 = vld [vmem:[#allocation7 + $0x38] sm:$0xff]
      %v345 = vld [vmem:[#allocation7 + $0x40] sm:$0xff]
      %v346 = vld [vmem:[#allocation7 + $0x48] sm:$0xff]
      %v347 = vld [vmem:[#allocation7 + $0x50] sm:$0xff]
      %v348 = vld [vmem:[#allocation7 + $0x58] sm:$0xff]
      %v349 = vld [vmem:[#allocation7 + $0x60] sm:$0xff]
      %v350 = vld [vmem:[#allocation7 + $0x68] sm:$0xff]
      %v351 = vld [vmem:[#allocation7 + $0x70] sm:$0xff]
      %v352 = vld [vmem:[#allocation7 + $0x78] sm:$0xff]
      %v353 = vld [vmem:[#allocation7 + $0x80] sm:$0xff]
      %v354 = vld [vmem:[#allocation7 + $0x88] sm:$0xff]
      %v355 = vld [vmem:[#allocation7 + $0x90] sm:$0xff]
      %v356 = vld [vmem:[#allocation7 + $0x98] sm:$0xff]
      %v357 = vld [vmem:[#allocation7 + $0xa0] sm:$0xff]
      %v358 = vld [vmem:[#allocation7 + $0xa8] sm:$0xff]
      %v359 = vld [vmem:[#allocation7 + $0xb0] sm:$0xff]
      %v360 = vld [vmem:[#allocation7 + $0xb8] sm:$0xff]
      %v361 = vld [vmem:[#allocation7 + $0xc0] sm:$0xff]
      %v362 = vld [vmem:[#allocation7 + $0xc8] sm:$0xff]
      %v363 = vld [vmem:[#allocation7 + $0xd0] sm:$0xff]
      %v364 = vld [vmem:[#allocation7 + $0xd8] sm:$0xff]
      %v365 = vld [vmem:[#allocation7 + $0xe0] sm:$0xff]
      %v366 = vld [vmem:[#allocation7 + $0xe8] sm:$0xff]
      %v367 = vld [vmem:[#allocation7 + $0xf0] sm:$0xff]
      %v368 = vld [vmem:[#allocation7 + $0xf8] sm:$0xff]
      %v369 = vld [vmem:[#allocation7 + $0x100] sm:$0xff]
      %v370 = vld [vmem:[#allocation7 + $0x108] sm:$0xff]
      %v371 = vld [vmem:[#allocation7 + $0x110] sm:$0xff]
      %v372 = vld [vmem:[#allocation7 + $0x118] sm:$0xff]
      %v373 = vld [vmem:[#allocation7 + $0x120] sm:$0xff]
      %v374 = vld [vmem:[#allocation7 + $0x128] sm:$0xff]
      %v375 = vld [vmem:[#allocation7 + $0x130] sm:$0xff]
      %v376 = vld [vmem:[#allocation7 + $0x138] sm:$0xff]
      %v377 = vld [vmem:[#allocation7 + $0x140] sm:$0xff]
      %v378 = vld [vmem:[#allocation7 + $0x148] sm:$0xff]
      %v379 = vld [vmem:[#allocation7 + $0x150] sm:$0xff]
      %v380 = vld [vmem:[#allocation7 + $0x158] sm:$0xff]
      %v381 = vld [vmem:[#allocation7 + $0x160] sm:$0xff]
      %v382 = vld [vmem:[#allocation7 + $0x168] sm:$0xff]
      %v383 = vld [vmem:[#allocation7 + $0x170] sm:$0xff]
      %v384 = vld [vmem:[#allocation7 + $0x178] sm:$0xff]
      %v385 = vld [vmem:[#allocation7 + $0x180] sm:$0xff]
      %v386 = vld [vmem:[#allocation7 + $0x188] sm:$0xff]
      %v387 = vld [vmem:[#allocation7 + $0x190] sm:$0xff]
      %v388 = vld [vmem:[#allocation7 + $0x198] sm:$0xff]
      %v389 = vld [vmem:[#allocation7 + $0x1a0] sm:$0xff]
      %v390 = vld [vmem:[#allocation7 + $0x1a8] sm:$0xff]
      %v391 = vld [vmem:[#allocation7 + $0x1b0] sm:$0xff]
      %v392 = vld [vmem:[#allocation7 + $0x1b8] sm:$0xff]
      %v393 = vld [vmem:[#allocation7 + $0x1c0] sm:$0xff]
      %v394 = vld [vmem:[#allocation7 + $0x1c8] sm:$0xff]
      %v395 = vld [vmem:[#allocation7 + $0x1d0] sm:$0xff]
      %v396 = vld [vmem:[#allocation7 + $0x1d8] sm:$0xff]
      %v397 = vld [vmem:[#allocation7 + $0x1e0] sm:$0xff]
      %v398 = vld [vmem:[#allocation7 + $0x1e8] sm:$0xff]
      %v399 = vld [vmem:[#allocation7 + $0x1f0] sm:$0xff]
      %v400 = vld [vmem:[#allocation7 + $0x1f8] sm:$0xff]
      %401 = vmatpush.msra.mxu0 %v397
      %402 = vmatpush.msra.mxu0 %v393
      %403 = vmatpush.msra.mxu0 %v389
      %404 = vmatpush.msra.mxu0 %v385
      %405 = vmatpush.msra.mxu0 %v381
      %406 = vmatpush.msra.mxu0 %v377
      %407 = vmatpush.msra.mxu0 %v373
      %408 = vmatpush.msra.mxu0 %v369
      %409 = vmatpush.msra.mxu0 %v365
      %410 = vmatpush.msra.mxu0 %v361
      %411 = vmatpush.msra.mxu0 %v357
      %412 = vmatpush.msra.mxu0 %v353
      %413 = vmatpush.msra.mxu0 %v349
      %414 = vmatpush.msra.mxu0 %v345
      %415 = vmatpush.msra.mxu0 %v341
      %416 = vmatpush.msra.mxu0 %v337
      %417 = vmatmul.f32.gmra.mxu0 0.0
      %v418 = vpop.f32.mrf.mxu0
      %v419 = vadd.f32 0.0, %v418
      %420 = vdwg.mxu0
      %421 = vmatpush.msra.mxu0 %v398
      %422 = vmatpush.msra.mxu0 %v394
      %423 = vmatpush.msra.mxu0 %v390
      %424 = vmatpush.msra.mxu0 %v386
      %425 = vmatpush.msra.mxu0 %v382
      %426 = vmatpush.msra.mxu0 %v378
      %427 = vmatpush.msra.mxu0 %v374
      %428 = vmatpush.msra.mxu0 %v370
      %429 = vmatpush.msra.mxu0 %v366
      %430 = vmatpush.msra.mxu0 %v362
      %431 = vmatpush.msra.mxu0 %v358
      %432 = vmatpush.msra.mxu0 %v354
      %433 = vmatpush.msra.mxu0 %v350
      %434 = vmatpush.msra.mxu0 %v346
      %435 = vmatpush.msra.mxu0 %v342
      %436 = vmatpush.msra.mxu0 %v338
      %437 = vmatmul.f32.gmra.mxu0 0.0
      %v438 = vpop.f32.mrf.mxu0
      %v439 = vadd.f32 0.0, %v438
      %440 = vdwg.mxu0
      %441 = vmatpush.msra.mxu0 %v399
      %442 = vmatpush.msra.mxu0 %v395
      %443 = vmatpush.msra.mxu0 %v391
      %444 = vmatpush.msra.mxu0 %v387
      %445 = vmatpush.msra.mxu0 %v383
      %446 = vmatpush.msra.mxu0 %v379
      %447 = vmatpush.msra.mxu0 %v375
      %448 = vmatpush.msra.mxu0 %v371
      %449 = vmatpush.msra.mxu0 %v367
      %450 = vmatpush.msra.mxu0 %v363
      %451 = vmatpush.msra.mxu0 %v359
      %452 = vmatpush.msra.mxu0 %v355
      %453 = vmatpush.msra.mxu0 %v351
      %454 = vmatpush.msra.mxu0 %v347
      %455 = vmatpush.msra.mxu0 %v343
      %456 = vmatpush.msra.mxu0 %v339
      %457 = vmatmul.f32.gmra.mxu0 0.0
      %v458 = vpop.f32.mrf.mxu0
      %v459 = vadd.f32 0.0, %v458
      %460 = vdwg.mxu0
      %461 = vmatpush.msra.mxu0 %v400
      %462 = vmatpush.msra.mxu0 %v396
      %463 = vmatpush.msra.mxu0 %v392
      %464 = vmatpush.msra.mxu0 %v388
      %465 = vmatpush.msra.mxu0 %v384
      %466 = vmatpush.msra.mxu0 %v380
      %467 = vmatpush.msra.mxu0 %v376
      %468 = vmatpush.msra.mxu0 %v372
      %469 = vmatpush.msra.mxu0 %v368
      %470 = vmatpush.msra.mxu0 %v364
      %471 = vmatpush.msra.mxu0 %v360
      %472 = vmatpush.msra.mxu0 %v356
      %473 = vmatpush.msra.mxu0 %v352
      %474 = vmatpush.msra.mxu0 %v348
      %475 = vmatpush.msra.mxu0 %v344
      %476 = vmatpush.msra.mxu0 %v340
      %477 = vmatmul.f32.gmra.mxu0 0.0
      %v478 = vpop.f32.mrf.mxu0
      %v479 = vadd.f32 0.0, %v478
      %480 = vdwg.mxu0
      %v481 = vadd.f32 %v333, %v419
      %v482 = vadd.f32 %v334, %v439
      %v483 = vadd.f32 %v335, %v459
      %v484 = vadd.f32 %v336, %v479
      %v485 = vxor.u32 %v481, 2147483648
      %v486 = vxor.u32 %v482, 2147483648
      %v487 = vxor.u32 %v483, 2147483648
      %v488 = vmul.f32 %v485, 1.442695
      %v489 = vpow.pop %v488
      %v490 = vmul.f32 %v486, 1.442695
      %v491 = vpow.pop %v490
      %v492 = vmul.f32 %v487, 1.442695
      %v493 = vpow.pop %v492
      %v494 = vadd.f32 %v489, 1.0
      %v495 = vadd.f32 %v491, 1.0
      %v496 = vadd.f32 %v493, 1.0
      %v497 = vrcp.pop %v494
      %v498 = vmul.f32 %v494, %v497
      %v499 = vsub.f32 1.0, %v498
      %v500 = vmul.f32 %v497, %v499
      %v501 = vadd.f32 %v497, %v500
      %vm502 = vweird.f32 %v494
      %vm503 = vweird.f32 %v497
      %vm504 = vmor %vm502, %vm503
      %v505 = vsel %vm504, %v497, %v501
      %v506 = vand.u32 2147483647, %v494
      %vm507 = vcmp.eq.f32.partialorder %v506, 8.507059e+37
      %v508 = vand.u32 %v494, 2147483648
      %v509 = vor.u32 1.1754944e-38, %v508
      %v510 = vsel %vm507, %v509, %v505
      %v511 = vmul.f32 1.0, %v510
      %v512 = vrcp.pop %v495
      %v513 = vmul.f32 %v495, %v512
      %v514 = vsub.f32 1.0, %v513
      %v515 = vmul.f32 %v512, %v514
      %v516 = vadd.f32 %v512, %v515
      %vm517 = vweird.f32 %v495
      %vm518 = vweird.f32 %v512
      %vm519 = vmor %vm517, %vm518
      %v520 = vsel %vm519, %v512, %v516
      %v521 = vand.u32 2147483647, %v495
      %vm522 = vcmp.eq.f32.partialorder %v521, 8.507059e+37
      %v523 = vand.u32 %v495, 2147483648
      %v524 = vor.u32 1.1754944e-38, %v523
      %v525 = vsel %vm522, %v524, %v520
      %v526 = vmul.f32 1.0, %v525
      %v527 = vrcp.pop %v496
      %v528 = vmul.f32 %v496, %v527
      %v529 = vsub.f32 1.0, %v528
      %v530 = vmul.f32 %v527, %v529
      %v531 = vadd.f32 %v527, %v530
      %vm532 = vweird.f32 %v496
      %vm533 = vweird.f32 %v527
      %vm534 = vmor %vm532, %vm533
      %v535 = vsel %vm534, %v527, %v531
      %v536 = vand.u32 2147483647, %v496
      %vm537 = vcmp.eq.f32.partialorder %v536, 8.507059e+37
      %v538 = vand.u32 %v496, 2147483648
      %v539 = vor.u32 1.1754944e-38, %v538
      %v540 = vsel %vm537, %v539, %v535
      %v541 = vmul.f32 1.0, %v540
      %v542 = vtanh.pop %v484
      %v543 = vmul.f32 %v526, 0.0
      %v544 = vmul.f32 %v511, %v542
      %v545 = vadd.f32 %v543, %v544
      %v546 = vtanh.pop %v545
      %v547 = vmul.f32 %v541, %v546
      %548 = vst [vmem:[#allocation3] sm:$0xff] %v547
      %s549 = smul.u32 1, 4
      %s550 = smul.addr %s549, 8
      %s551 = scalar_lea.vmem [#allocation2], %s550
      %v552 = vld [vmem:[%s551] sm:$0xff]
      %v553 = vld [vmem:[%s551 + $0x8] sm:$0xff]
      %v554 = vld [vmem:[%s551 + $0x10] sm:$0xff]
      %v555 = vld [vmem:[%s551 + $0x18] sm:$0xff]
      %v556 = vld [vmem:[#allocation7] sm:$0xff]
      %v557 = vld [vmem:[#allocation7 + $0x8] sm:$0xff]
      %v558 = vld [vmem:[#allocation7 + $0x10] sm:$0xff]
      %v559 = vld [vmem:[#allocation7 + $0x18] sm:$0xff]
      %v560 = vld [vmem:[#allocation7 + $0x20] sm:$0xff]
      %v561 = vld [vmem:[#allocation7 + $0x28] sm:$0xff]
      %v562 = vld [vmem:[#allocation7 + $0x30] sm:$0xff]
      %v563 = vld [vmem:[#allocation7 + $0x38] sm:$0xff]
      %v564 = vld [vmem:[#allocation7 + $0x40] sm:$0xff]
      %v565 = vld [vmem:[#allocation7 + $0x48] sm:$0xff]
      %v566 = vld [vmem:[#allocation7 + $0x50] sm:$0xff]
      %v567 = vld [vmem:[#allocation7 + $0x58] sm:$0xff]
      %v568 = vld [vmem:[#allocation7 + $0x60] sm:$0xff]
      %v569 = vld [vmem:[#allocation7 + $0x68] sm:$0xff]
      %v570 = vld [vmem:[#allocation7 + $0x70] sm:$0xff]
      %v571 = vld [vmem:[#allocation7 + $0x78] sm:$0xff]
      %v572 = vld [vmem:[#allocation7 + $0x80] sm:$0xff]
      %v573 = vld [vmem:[#allocation7 + $0x88] sm:$0xff]
      %v574 = vld [vmem:[#allocation7 + $0x90] sm:$0xff]
      %v575 = vld [vmem:[#allocation7 + $0x98] sm:$0xff]
      %v576 = vld [vmem:[#allocation7 + $0xa0] sm:$0xff]
      %v577 = vld [vmem:[#allocation7 + $0xa8] sm:$0xff]
      %v578 = vld [vmem:[#allocation7 + $0xb0] sm:$0xff]
      %v579 = vld [vmem:[#allocation7 + $0xb8] sm:$0xff]
      %v580 = vld [vmem:[#allocation7 + $0xc0] sm:$0xff]
      %v581 = vld [vmem:[#allocation7 + $0xc8] sm:$0xff]
      %v582 = vld [vmem:[#allocation7 + $0xd0] sm:$0xff]
      %v583 = vld [vmem:[#allocation7 + $0xd8] sm:$0xff]
      %v584 = vld [vmem:[#allocation7 + $0xe0] sm:$0xff]
      %v585 = vld [vmem:[#allocation7 + $0xe8] sm:$0xff]
      %v586 = vld [vmem:[#allocation7 + $0xf0] sm:$0xff]
      %v587 = vld [vmem:[#allocation7 + $0xf8] sm:$0xff]
      %v588 = vld [vmem:[#allocation7 + $0x100] sm:$0xff]
      %v589 = vld [vmem:[#allocation7 + $0x108] sm:$0xff]
      %v590 = vld [vmem:[#allocation7 + $0x110] sm:$0xff]
      %v591 = vld [vmem:[#allocation7 + $0x118] sm:$0xff]
      %v592 = vld [vmem:[#allocation7 + $0x120] sm:$0xff]
      %v593 = vld [vmem:[#allocation7 + $0x128] sm:$0xff]
      %v594 = vld [vmem:[#allocation7 + $0x130] sm:$0xff]
      %v595 = vld [vmem:[#allocation7 + $0x138] sm:$0xff]
      %v596 = vld [vmem:[#allocation7 + $0x140] sm:$0xff]
      %v597 = vld [vmem:[#allocation7 + $0x148] sm:$0xff]
      %v598 = vld [vmem:[#allocation7 + $0x150] sm:$0xff]
      %v599 = vld [vmem:[#allocation7 + $0x158] sm:$0xff]
      %v600 = vld [vmem:[#allocation7 + $0x160] sm:$0xff]
      %v601 = vld [vmem:[#allocation7 + $0x168] sm:$0xff]
      %v602 = vld [vmem:[#allocation7 + $0x170] sm:$0xff]
      %v603 = vld [vmem:[#allocation7 + $0x178] sm:$0xff]
      %v604 = vld [vmem:[#allocation7 + $0x180] sm:$0xff]
      %v605 = vld [vmem:[#allocation7 + $0x188] sm:$0xff]
      %v606 = vld [vmem:[#allocation7 + $0x190] sm:$0xff]
      %v607 = vld [vmem:[#allocation7 + $0x198] sm:$0xff]
      %v608 = vld [vmem:[#allocation7 + $0x1a0] sm:$0xff]
      %v609 = vld [vmem:[#allocation7 + $0x1a8] sm:$0xff]
      %v610 = vld [vmem:[#allocation7 + $0x1b0] sm:$0xff]
      %v611 = vld [vmem:[#allocation7 + $0x1b8] sm:$0xff]
      %v612 = vld [vmem:[#allocation7 + $0x1c0] sm:$0xff]
      %v613 = vld [vmem:[#allocation7 + $0x1c8] sm:$0xff]
      %v614 = vld [vmem:[#allocation7 + $0x1d0] sm:$0xff]
      %v615 = vld [vmem:[#allocation7 + $0x1d8] sm:$0xff]
      %v616 = vld [vmem:[#allocation7 + $0x1e0] sm:$0xff]
      %v617 = vld [vmem:[#allocation7 + $0x1e8] sm:$0xff]
      %v618 = vld [vmem:[#allocation7 + $0x1f0] sm:$0xff]
      %v619 = vld [vmem:[#allocation7 + $0x1f8] sm:$0xff]
      %620 = vmatpush.msra.mxu0 %v616
      %621 = vmatpush.msra.mxu0 %v612
      %622 = vmatpush.msra.mxu0 %v608
      %623 = vmatpush.msra.mxu0 %v604
      %624 = vmatpush.msra.mxu0 %v600
      %625 = vmatpush.msra.mxu0 %v596
      %626 = vmatpush.msra.mxu0 %v592
      %627 = vmatpush.msra.mxu0 %v588
      %628 = vmatpush.msra.mxu0 %v584
      %629 = vmatpush.msra.mxu0 %v580
      %630 = vmatpush.msra.mxu0 %v576
      %631 = vmatpush.msra.mxu0 %v572
      %632 = vmatpush.msra.mxu0 %v568
      %633 = vmatpush.msra.mxu0 %v564
      %634 = vmatpush.msra.mxu0 %v560
      %635 = vmatpush.msra.mxu0 %v556
      %636 = vmatmul.f32.gmra.mxu0 %v547
      %v637 = vpop.f32.mrf.mxu0
      %v638 = vadd.f32 0.0, %v637
      %639 = vdwg.mxu0
      %640 = vmatpush.msra.mxu0 %v617
      %641 = vmatpush.msra.mxu0 %v613
      %642 = vmatpush.msra.mxu0 %v609
      %643 = vmatpush.msra.mxu0 %v605
      %644 = vmatpush.msra.mxu0 %v601
      %645 = vmatpush.msra.mxu0 %v597
      %646 = vmatpush.msra.mxu0 %v593
      %647 = vmatpush.msra.mxu0 %v589
      %648 = vmatpush.msra.mxu0 %v585
      %649 = vmatpush.msra.mxu0 %v581
      %650 = vmatpush.msra.mxu0 %v577
      %651 = vmatpush.msra.mxu0 %v573
      %652 = vmatpush.msra.mxu0 %v569
      %653 = vmatpush.msra.mxu0 %v565
      %654 = vmatpush.msra.mxu0 %v561
      %655 = vmatpush.msra.mxu0 %v557
      %656 = vmatmul.f32.gmra.mxu0 %v547
      %v657 = vpop.f32.mrf.mxu0
      %v658 = vadd.f32 0.0, %v657
      %659 = vdwg.mxu0
      %660 = vmatpush.msra.mxu0 %v618
      %661 = vmatpush.msra.mxu0 %v614
      %662 = vmatpush.msra.mxu0 %v610
      %663 = vmatpush.msra.mxu0 %v606
      %664 = vmatpush.msra.mxu0 %v602
      %665 = vmatpush.msra.mxu0 %v598
      %666 = vmatpush.msra.mxu0 %v594
      %667 = vmatpush.msra.mxu0 %v590
      %668 = vmatpush.msra.mxu0 %v586
      %669 = vmatpush.msra.mxu0 %v582
      %670 = vmatpush.msra.mxu0 %v578
      %671 = vmatpush.msra.mxu0 %v574
      %672 = vmatpush.msra.mxu0 %v570
      %673 = vmatpush.msra.mxu0 %v566
      %674 = vmatpush.msra.mxu0 %v562
      %675 = vmatpush.msra.mxu0 %v558
      %676 = vmatmul.f32.gmra.mxu0 %v547
      %v677 = vpop.f32.mrf.mxu0
      %v678 = vadd.f32 0.0, %v677
      %679 = vdwg.mxu0
      %680 = vmatpush.msra.mxu0 %v619
      %681 = vmatpush.msra.mxu0 %v615
      %682 = vmatpush.msra.mxu0 %v611
      %683 = vmatpush.msra.mxu0 %v607
      %684 = vmatpush.msra.mxu0 %v603
      %685 = vmatpush.msra.mxu0 %v599
      %686 = vmatpush.msra.mxu0 %v595
      %687 = vmatpush.msra.mxu0 %v591
      %688 = vmatpush.msra.mxu0 %v587
      %689 = vmatpush.msra.mxu0 %v583
      %690 = vmatpush.msra.mxu0 %v579
      %691 = vmatpush.msra.mxu0 %v575
      %692 = vmatpush.msra.mxu0 %v571
      %693 = vmatpush.msra.mxu0 %v567
      %694 = vmatpush.msra.mxu0 %v563
      %695 = vmatpush.msra.mxu0 %v559
      %696 = vmatmul.f32.gmra.mxu0 %v547
      %v697 = vpop.f32.mrf.mxu0
      %v698 = vadd.f32 0.0, %v697
      %699 = vdwg.mxu0
      %v700 = vadd.f32 %v552, %v638
      %v701 = vadd.f32 %v553, %v658
      %v702 = vadd.f32 %v554, %v678
      %v703 = vadd.f32 %v555, %v698
      %v704 = vxor.u32 %v700, 2147483648
      %v705 = vxor.u32 %v701, 2147483648
      %v706 = vxor.u32 %v702, 2147483648
      %v707 = vmul.f32 %v704, 1.442695
      %v708 = vpow.pop %v707
      %v709 = vmul.f32 %v705, 1.442695
      %v710 = vpow.pop %v709
      %v711 = vmul.f32 %v706, 1.442695
      %v712 = vpow.pop %v711
      %v713 = vadd.f32 %v708, 1.0
      %v714 = vadd.f32 %v710, 1.0
      %v715 = vadd.f32 %v712, 1.0
      %v716 = vrcp.pop %v713
      %v717 = vmul.f32 %v713, %v716
      %v718 = vsub.f32 1.0, %v717
      %v719 = vmul.f32 %v716, %v718
      %v720 = vadd.f32 %v716, %v719
      %vm721 = vweird.f32 %v713
      %vm722 = vweird.f32 %v716
      %vm723 = vmor %vm721, %vm722
      %v724 = vsel %vm723, %v716, %v720
      %v725 = vand.u32 2147483647, %v713
      %vm726 = vcmp.eq.f32.partialorder %v725, 8.507059e+37
      %v727 = vand.u32 %v713, 2147483648
      %v728 = vor.u32 1.1754944e-38, %v727
      %v729 = vsel %vm726, %v728, %v724
      %v730 = vmul.f32 1.0, %v729
      %v731 = vrcp.pop %v714
      %v732 = vmul.f32 %v714, %v731
      %v733 = vsub.f32 1.0, %v732
      %v734 = vmul.f32 %v731, %v733
      %v735 = vadd.f32 %v731, %v734
      %vm736 = vweird.f32 %v714
      %vm737 = vweird.f32 %v731
      %vm738 = vmor %vm736, %vm737
      %v739 = vsel %vm738, %v731, %v735
      %v740 = vand.u32 2147483647, %v714
      %vm741 = vcmp.eq.f32.partialorder %v740, 8.507059e+37
      %v742 = vand.u32 %v714, 2147483648
      %v743 = vor.u32 1.1754944e-38, %v742
      %v744 = vsel %vm741, %v743, %v739
      %v745 = vmul.f32 1.0, %v744
      %v746 = vrcp.pop %v715
      %v747 = vmul.f32 %v715, %v746
      %v748 = vsub.f32 1.0, %v747
      %v749 = vmul.f32 %v746, %v748
      %v750 = vadd.f32 %v746, %v749
      %vm751 = vweird.f32 %v715
      %vm752 = vweird.f32 %v746
      %vm753 = vmor %vm751, %vm752
      %v754 = vsel %vm753, %v746, %v750
      %v755 = vand.u32 2147483647, %v715
      %vm756 = vcmp.eq.f32.partialorder %v755, 8.507059e+37
      %v757 = vand.u32 %v715, 2147483648
      %v758 = vor.u32 1.1754944e-38, %v757
      %v759 = vsel %vm756, %v758, %v754
      %v760 = vmul.f32 1.0, %v759
      %v761 = vtanh.pop %v703
      %v762 = vmul.f32 %v745, %v545
      %v763 = vmul.f32 %v730, %v761
      %v764 = vadd.f32 %v762, %v763
      %v765 = vtanh.pop %v764
      %v766 = vmul.f32 %v760, %v765
      %s767 = scalar_lea.vmem [#allocation3], 8
      %768 = vst [vmem:[%s767] sm:$0xff] %v766
      %s769 = smul.u32 2, 4
      %s770 = smul.addr %s769, 8
      %s771 = scalar_lea.vmem [#allocation2], %s770
      %v772 = vld [vmem:[%s771] sm:$0xff]
      %v773 = vld [vmem:[%s771 + $0x8] sm:$0xff]
      %v774 = vld [vmem:[%s771 + $0x10] sm:$0xff]
      %v775 = vld [vmem:[%s771 + $0x18] sm:$0xff]
      %v776 = vld [vmem:[#allocation7] sm:$0xff]
      %v777 = vld [vmem:[#allocation7 + $0x8] sm:$0xff]
      %v778 = vld [vmem:[#allocation7 + $0x10] sm:$0xff]
      %v779 = vld [vmem:[#allocation7 + $0x18] sm:$0xff]
      %v780 = vld [vmem:[#allocation7 + $0x20] sm:$0xff]
      %v781 = vld [vmem:[#allocation7 + $0x28] sm:$0xff]
      %v782 = vld [vmem:[#allocation7 + $0x30] sm:$0xff]
      %v783 = vld [vmem:[#allocation7 + $0x38] sm:$0xff]
      %v784 = vld [vmem:[#allocation7 + $0x40] sm:$0xff]
      %v785 = vld [vmem:[#allocation7 + $0x48] sm:$0xff]
      %v786 = vld [vmem:[#allocation7 + $0x50] sm:$0xff]
      %v787 = vld [vmem:[#allocation7 + $0x58] sm:$0xff]
      %v788 = vld [vmem:[#allocation7 + $0x60] sm:$0xff]
      %v789 = vld [vmem:[#allocation7 + $0x68] sm:$0xff]
      %v790 = vld [vmem:[#allocation7 + $0x70] sm:$0xff]
      %v791 = vld [vmem:[#allocation7 + $0x78] sm:$0xff]
      %v792 = vld [vmem:[#allocation7 + $0x80] sm:$0xff]
      %v793 = vld [vmem:[#allocation7 + $0x88] sm:$0xff]
      %v794 = vld [vmem:[#allocation7 + $0x90] sm:$0xff]
      %v795 = vld [vmem:[#allocation7 + $0x98] sm:$0xff]
      %v796 = vld [vmem:[#allocation7 + $0xa0] sm:$0xff]
      %v797 = vld [vmem:[#allocation7 + $0xa8] sm:$0xff]
      %v798 = vld [vmem:[#allocation7 + $0xb0] sm:$0xff]
      %v799 = vld [vmem:[#allocation7 + $0xb8] sm:$0xff]
      %v800 = vld [vmem:[#allocation7 + $0xc0] sm:$0xff]
      %v801 = vld [vmem:[#allocation7 + $0xc8] sm:$0xff]
      %v802 = vld [vmem:[#allocation7 + $0xd0] sm:$0xff]
      %v803 = vld [vmem:[#allocation7 + $0xd8] sm:$0xff]
      %v804 = vld [vmem:[#allocation7 + $0xe0] sm:$0xff]
      %v805 = vld [vmem:[#allocation7 + $0xe8] sm:$0xff]
      %v806 = vld [vmem:[#allocation7 + $0xf0] sm:$0xff]
      %v807 = vld [vmem:[#allocation7 + $0xf8] sm:$0xff]
      %v808 = vld [vmem:[#allocation7 + $0x100] sm:$0xff]
      %v809 = vld [vmem:[#allocation7 + $0x108] sm:$0xff]
      %v810 = vld [vmem:[#allocation7 + $0x110] sm:$0xff]
      %v811 = vld [vmem:[#allocation7 + $0x118] sm:$0xff]
      %v812 = vld [vmem:[#allocation7 + $0x120] sm:$0xff]
      %v813 = vld [vmem:[#allocation7 + $0x128] sm:$0xff]
      %v814 = vld [vmem:[#allocation7 + $0x130] sm:$0xff]
      %v815 = vld [vmem:[#allocation7 + $0x138] sm:$0xff]
      %v816 = vld [vmem:[#allocation7 + $0x140] sm:$0xff]
      %v817 = vld [vmem:[#allocation7 + $0x148] sm:$0xff]
      %v818 = vld [vmem:[#allocation7 + $0x150] sm:$0xff]
      %v819 = vld [vmem:[#allocation7 + $0x158] sm:$0xff]
      %v820 = vld [vmem:[#allocation7 + $0x160] sm:$0xff]
      %v821 = vld [vmem:[#allocation7 + $0x168] sm:$0xff]
      %v822 = vld [vmem:[#allocation7 + $0x170] sm:$0xff]
      %v823 = vld [vmem:[#allocation7 + $0x178] sm:$0xff]
      %v824 = vld [vmem:[#allocation7 + $0x180] sm:$0xff]
      %v825 = vld [vmem:[#allocation7 + $0x188] sm:$0xff]
      %v826 = vld [vmem:[#allocation7 + $0x190] sm:$0xff]
      %v827 = vld [vmem:[#allocation7 + $0x198] sm:$0xff]
      %v828 = vld [vmem:[#allocation7 + $0x1a0] sm:$0xff]
      %v829 = vld [vmem:[#allocation7 + $0x1a8] sm:$0xff]
      %v830 = vld [vmem:[#allocation7 + $0x1b0] sm:$0xff]
      %v831 = vld [vmem:[#allocation7 + $0x1b8] sm:$0xff]
      %v832 = vld [vmem:[#allocation7 + $0x1c0] sm:$0xff]
      %v833 = vld [vmem:[#allocation7 + $0x1c8] sm:$0xff]
      %v834 = vld [vmem:[#allocation7 + $0x1d0] sm:$0xff]
      %v835 = vld [vmem:[#allocation7 + $0x1d8] sm:$0xff]
      %v836 = vld [vmem:[#allocation7 + $0x1e0] sm:$0xff]
      %v837 = vld [vmem:[#allocation7 + $0x1e8] sm:$0xff]
      %v838 = vld [vmem:[#allocation7 + $0x1f0] sm:$0xff]
      %v839 = vld [vmem:[#allocation7 + $0x1f8] sm:$0xff]
      %840 = vmatpush.msra.mxu0 %v836
      %841 = vmatpush.msra.mxu0 %v832
      %842 = vmatpush.msra.mxu0 %v828
      %843 = vmatpush.msra.mxu0 %v824
      %844 = vmatpush.msra.mxu0 %v820
      %845 = vmatpush.msra.mxu0 %v816
      %846 = vmatpush.msra.mxu0 %v812
      %847 = vmatpush.msra.mxu0 %v808
      %848 = vmatpush.msra.mxu0 %v804
      %849 = vmatpush.msra.mxu0 %v800
      %850 = vmatpush.msra.mxu0 %v796
      %851 = vmatpush.msra.mxu0 %v792
      %852 = vmatpush.msra.mxu0 %v788
      %853 = vmatpush.msra.mxu0 %v784
      %854 = vmatpush.msra.mxu0 %v780
      %855 = vmatpush.msra.mxu0 %v776
      %856 = vmatmul.f32.gmra.mxu0 %v766
      %v857 = vpop.f32.mrf.mxu0
      %v858 = vadd.f32 0.0, %v857
      %859 = vdwg.mxu0
      %860 = vmatpush.msra.mxu0 %v837
      %861 = vmatpush.msra.mxu0 %v833
      %862 = vmatpush.msra.mxu0 %v829
      %863 = vmatpush.msra.mxu0 %v825
      %864 = vmatpush.msra.mxu0 %v821
      %865 = vmatpush.msra.mxu0 %v817
      %866 = vmatpush.msra.mxu0 %v813
      %867 = vmatpush.msra.mxu0 %v809
      %868 = vmatpush.msra.mxu0 %v805
      %869 = vmatpush.msra.mxu0 %v801
      %870 = vmatpush.msra.mxu0 %v797
      %871 = vmatpush.msra.mxu0 %v793
      %872 = vmatpush.msra.mxu0 %v789
      %873 = vmatpush.msra.mxu0 %v785
      %874 = vmatpush.msra.mxu0 %v781
      %875 = vmatpush.msra.mxu0 %v777
      %876 = vmatmul.f32.gmra.mxu0 %v766
      %v877 = vpop.f32.mrf.mxu0
      %v878 = vadd.f32 0.0, %v877
      %879 = vdwg.mxu0
      %880 = vmatpush.msra.mxu0 %v838
      %881 = vmatpush.msra.mxu0 %v834
      %882 = vmatpush.msra.mxu0 %v830
      %883 = vmatpush.msra.mxu0 %v826
      %884 = vmatpush.msra.mxu0 %v822
      %885 = vmatpush.msra.mxu0 %v818
      %886 = vmatpush.msra.mxu0 %v814
      %887 = vmatpush.msra.mxu0 %v810
      %888 = vmatpush.msra.mxu0 %v806
      %889 = vmatpush.msra.mxu0 %v802
      %890 = vmatpush.msra.mxu0 %v798
      %891 = vmatpush.msra.mxu0 %v794
      %892 = vmatpush.msra.mxu0 %v790
      %893 = vmatpush.msra.mxu0 %v786
      %894 = vmatpush.msra.mxu0 %v782
      %895 = vmatpush.msra.mxu0 %v778
      %896 = vmatmul.f32.gmra.mxu0 %v766
      %v897 = vpop.f32.mrf.mxu0
      %v898 = vadd.f32 0.0, %v897
      %899 = vdwg.mxu0
      %900 = vmatpush.msra.mxu0 %v839
      %901 = vmatpush.msra.mxu0 %v835
      %902 = vmatpush.msra.mxu0 %v831
      %903 = vmatpush.msra.mxu0 %v827
      %904 = vmatpush.msra.mxu0 %v823
      %905 = vmatpush.msra.mxu0 %v819
      %906 = vmatpush.msra.mxu0 %v815
      %907 = vmatpush.msra.mxu0 %v811
      %908 = vmatpush.msra.mxu0 %v807
      %909 = vmatpush.msra.mxu0 %v803
      %910 = vmatpush.msra.mxu0 %v799
      %911 = vmatpush.msra.mxu0 %v795
      %912 = vmatpush.msra.mxu0 %v791
      %913 = vmatpush.msra.mxu0 %v787
      %914 = vmatpush.msra.mxu0 %v783
      %915 = vmatpush.msra.mxu0 %v779
      %916 = vmatmul.f32.gmra.mxu0 %v766
      %v917 = vpop.f32.mrf.mxu0
      %v918 = vadd.f32 0.0, %v917
      %919 = vdwg.mxu0
      %v920 = vadd.f32 %v772, %v858
      %v921 = vadd.f32 %v773, %v878
      %v922 = vadd.f32 %v774, %v898
      %v923 = vadd.f32 %v775, %v918
      %v924 = vxor.u32 %v920, 2147483648
      %v925 = vxor.u32 %v921, 2147483648
      %v926 = vxor.u32 %v922, 2147483648
      %v927 = vmul.f32 %v924, 1.442695
      %v928 = vpow.pop %v927
      %v929 = vmul.f32 %v925, 1.442695
      %v930 = vpow.pop %v929
      %v931 = vmul.f32 %v926, 1.442695
      %v932 = vpow.pop %v931
      %v933 = vadd.f32 %v928, 1.0
      %v934 = vadd.f32 %v930, 1.0
      %v935 = vadd.f32 %v932, 1.0
      %v936 = vrcp.pop %v933
      %v937 = vmul.f32 %v933, %v936
      %v938 = vsub.f32 1.0, %v937
      %v939 = vmul.f32 %v936, %v938
      %v940 = vadd.f32 %v936, %v939
      %vm941 = vweird.f32 %v933
      %vm942 = vweird.f32 %v936
      %vm943 = vmor %vm941, %vm942
      %v944 = vsel %vm943, %v936, %v940
      %v945 = vand.u32 2147483647, %v933
      %vm946 = vcmp.eq.f32.partialorder %v945, 8.507059e+37
      %v947 = vand.u32 %v933, 2147483648
      %v948 = vor.u32 1.1754944e-38, %v947
      %v949 = vsel %vm946, %v948, %v944
      %v950 = vmul.f32 1.0, %v949
      %v951 = vrcp.pop %v934
      %v952 = vmul.f32 %v934, %v951
      %v953 = vsub.f32 1.0, %v952
      %v954 = vmul.f32 %v951, %v953
      %v955 = vadd.f32 %v951, %v954
      %vm956 = vweird.f32 %v934
      %vm957 = vweird.f32 %v951
      %vm958 = vmor %vm956, %vm957
      %v959 = vsel %vm958, %v951, %v955
      %v960 = vand.u32 2147483647, %v934
      %vm961 = vcmp.eq.f32.partialorder %v960, 8.507059e+37
      %v962 = vand.u32 %v934, 2147483648
      %v963 = vor.u32 1.1754944e-38, %v962
      %v964 = vsel %vm961, %v963, %v959
      %v965 = vmul.f32 1.0, %v964
      %v966 = vrcp.pop %v935
      %v967 = vmul.f32 %v935, %v966
      %v968 = vsub.f32 1.0, %v967
      %v969 = vmul.f32 %v966, %v968
      %v970 = vadd.f32 %v966, %v969
      %vm971 = vweird.f32 %v935
      %vm972 = vweird.f32 %v966
      %vm973 = vmor %vm971, %vm972
      %v974 = vsel %vm973, %v966, %v970
      %v975 = vand.u32 2147483647, %v935
      %vm976 = vcmp.eq.f32.partialorder %v975, 8.507059e+37
      %v977 = vand.u32 %v935, 2147483648
      %v978 = vor.u32 1.1754944e-38, %v977
      %v979 = vsel %vm976, %v978, %v974
      %v980 = vmul.f32 1.0, %v979
      %v981 = vtanh.pop %v923
      %v982 = vmul.f32 %v965, %v764
      %v983 = vmul.f32 %v950, %v981
      %v984 = vadd.f32 %v982, %v983
      %v985 = vtanh.pop %v984
      %v986 = vmul.f32 %v980, %v985
      %s987 = scalar_lea.vmem [#allocation3], 16
      %988 = vst [vmem:[%s987] sm:$0xff] %v986
      %s989 = smul.u32 3, 4
      %s990 = smul.addr %s989, 8
      %s991 = scalar_lea.vmem [#allocation2], %s990
      %v992 = vld [vmem:[%s991] sm:$0xff]
      %v993 = vld [vmem:[%s991 + $0x8] sm:$0xff]
      %v994 = vld [vmem:[%s991 + $0x10] sm:$0xff]
      %v995 = vld [vmem:[%s991 + $0x18] sm:$0xff]
      %v996 = vld [vmem:[#allocation7] sm:$0xff]
      %v997 = vld [vmem:[#allocation7 + $0x8] sm:$0xff]
      %v998 = vld [vmem:[#allocation7 + $0x10] sm:$0xff]
      %v999 = vld [vmem:[#allocation7 + $0x18] sm:$0xff]
      %v1000 = vld [vmem:[#allocation7 + $0x20] sm:$0xff]
      %v1001 = vld [vmem:[#allocation7 + $0x28] sm:$0xff]
      %v1002 = vld [vmem:[#allocation7 + $0x30] sm:$0xff]
      %v1003 = vld [vmem:[#allocation7 + $0x38] sm:$0xff]
      %v1004 = vld [vmem:[#allocation7 + $0x40] sm:$0xff]
      %v1005 = vld [vmem:[#allocation7 + $0x48] sm:$0xff]
      %v1006 = vld [vmem:[#allocation7 + $0x50] sm:$0xff]
      %v1007 = vld [vmem:[#allocation7 + $0x58] sm:$0xff]
      %v1008 = vld [vmem:[#allocation7 + $0x60] sm:$0xff]
      %v1009 = vld [vmem:[#allocation7 + $0x68] sm:$0xff]
      %v1010 = vld [vmem:[#allocation7 + $0x70] sm:$0xff]
      %v1011 = vld [vmem:[#allocation7 + $0x78] sm:$0xff]
      %v1012 = vld [vmem:[#allocation7 + $0x80] sm:$0xff]
      %v1013 = vld [vmem:[#allocation7 + $0x88] sm:$0xff]
      %v1014 = vld [vmem:[#allocation7 + $0x90] sm:$0xff]
      %v1015 = vld [vmem:[#allocation7 + $0x98] sm:$0xff]
      %v1016 = vld [vmem:[#allocation7 + $0xa0] sm:$0xff]
      %v1017 = vld [vmem:[#allocation7 + $0xa8] sm:$0xff]
      %v1018 = vld [vmem:[#allocation7 + $0xb0] sm:$0xff]
      %v1019 = vld [vmem:[#allocation7 + $0xb8] sm:$0xff]
      %v1020 = vld [vmem:[#allocation7 + $0xc0] sm:$0xff]
      %v1021 = vld [vmem:[#allocation7 + $0xc8] sm:$0xff]
      %v1022 = vld [vmem:[#allocation7 + $0xd0] sm:$0xff]
      %v1023 = vld [vmem:[#allocation7 + $0xd8] sm:$0xff]
      %v1024 = vld [vmem:[#allocation7 + $0xe0] sm:$0xff]
      %v1025 = vld [vmem:[#allocation7 + $0xe8] sm:$0xff]
      %v1026 = vld [vmem:[#allocation7 + $0xf0] sm:$0xff]
      %v1027 = vld [vmem:[#allocation7 + $0xf8] sm:$0xff]
      %v1028 = vld [vmem:[#allocation7 + $0x100] sm:$0xff]
      %v1029 = vld [vmem:[#allocation7 + $0x108] sm:$0xff]
      %v1030 = vld [vmem:[#allocation7 + $0x110] sm:$0xff]
      %v1031 = vld [vmem:[#allocation7 + $0x118] sm:$0xff]
      %v1032 = vld [vmem:[#allocation7 + $0x120] sm:$0xff]
      %v1033 = vld [vmem:[#allocation7 + $0x128] sm:$0xff]
      %v1034 = vld [vmem:[#allocation7 + $0x130] sm:$0xff]
      %v1035 = vld [vmem:[#allocation7 + $0x138] sm:$0xff]
      %v1036 = vld [vmem:[#allocation7 + $0x140] sm:$0xff]
      %v1037 = vld [vmem:[#allocation7 + $0x148] sm:$0xff]
      %v1038 = vld [vmem:[#allocation7 + $0x150] sm:$0xff]
      %v1039 = vld [vmem:[#allocation7 + $0x158] sm:$0xff]
      %v1040 = vld [vmem:[#allocation7 + $0x160] sm:$0xff]
      %v1041 = vld [vmem:[#allocation7 + $0x168] sm:$0xff]
      %v1042 = vld [vmem:[#allocation7 + $0x170] sm:$0xff]
      %v1043 = vld [vmem:[#allocation7 + $0x178] sm:$0xff]
      %v1044 = vld [vmem:[#allocation7 + $0x180] sm:$0xff]
      %v1045 = vld [vmem:[#allocation7 + $0x188] sm:$0xff]
      %v1046 = vld [vmem:[#allocation7 + $0x190] sm:$0xff]
      %v1047 = vld [vmem:[#allocation7 + $0x198] sm:$0xff]
      %v1048 = vld [vmem:[#allocation7 + $0x1a0] sm:$0xff]
      %v1049 = vld [vmem:[#allocation7 + $0x1a8] sm:$0xff]
      %v1050 = vld [vmem:[#allocation7 + $0x1b0] sm:$0xff]
      %v1051 = vld [vmem:[#allocation7 + $0x1b8] sm:$0xff]
      %v1052 = vld [vmem:[#allocation7 + $0x1c0] sm:$0xff]
      %v1053 = vld [vmem:[#allocation7 + $0x1c8] sm:$0xff]
      %v1054 = vld [vmem:[#allocation7 + $0x1d0] sm:$0xff]
      %v1055 = vld [vmem:[#allocation7 + $0x1d8] sm:$0xff]
      %v1056 = vld [vmem:[#allocation7 + $0x1e0] sm:$0xff]
      %v1057 = vld [vmem:[#allocation7 + $0x1e8] sm:$0xff]
      %v1058 = vld [vmem:[#allocation7 + $0x1f0] sm:$0xff]
      %v1059 = vld [vmem:[#allocation7 + $0x1f8] sm:$0xff]
      %1060 = vmatpush.msra.mxu0 %v1056
      %1061 = vmatpush.msra.mxu0 %v1052
      %1062 = vmatpush.msra.mxu0 %v1048
      %1063 = vmatpush.msra.mxu0 %v1044
      %1064 = vmatpush.msra.mxu0 %v1040
      %1065 = vmatpush.msra.mxu0 %v1036
      %1066 = vmatpush.msra.mxu0 %v1032
      %1067 = vmatpush.msra.mxu0 %v1028
      %1068 = vmatpush.msra.mxu0 %v1024
      %1069 = vmatpush.msra.mxu0 %v1020
      %1070 = vmatpush.msra.mxu0 %v1016
      %1071 = vmatpush.msra.mxu0 %v1012
      %1072 = vmatpush.msra.mxu0 %v1008
      %1073 = vmatpush.msra.mxu0 %v1004
      %1074 = vmatpush.msra.mxu0 %v1000
      %1075 = vmatpush.msra.mxu0 %v996
      %1076 = vmatmul.f32.gmra.mxu0 %v986
      %v1077 = vpop.f32.mrf.mxu0
      %v1078 = vadd.f32 0.0, %v1077
      %1079 = vdwg.mxu0
      %1080 = vmatpush.msra.mxu0 %v1057
      %1081 = vmatpush.msra.mxu0 %v1053
      %1082 = vmatpush.msra.mxu0 %v1049
      %1083 = vmatpush.msra.mxu0 %v1045
      %1084 = vmatpush.msra.mxu0 %v1041
      %1085 = vmatpush.msra.mxu0 %v1037
      %1086 = vmatpush.msra.mxu0 %v1033
      %1087 = vmatpush.msra.mxu0 %v1029
      %1088 = vmatpush.msra.mxu0 %v1025
      %1089 = vmatpush.msra.mxu0 %v1021
      %1090 = vmatpush.msra.mxu0 %v1017
      %1091 = vmatpush.msra.mxu0 %v1013
      %1092 = vmatpush.msra.mxu0 %v1009
      %1093 = vmatpush.msra.mxu0 %v1005
      %1094 = vmatpush.msra.mxu0 %v1001
      %1095 = vmatpush.msra.mxu0 %v997
      %1096 = vmatmul.f32.gmra.mxu0 %v986
      %v1097 = vpop.f32.mrf.mxu0
      %v1098 = vadd.f32 0.0, %v1097
      %1099 = vdwg.mxu0
      %1100 = vmatpush.msra.mxu0 %v1058
      %1101 = vmatpush.msra.mxu0 %v1054
      %1102 = vmatpush.msra.mxu0 %v1050
      %1103 = vmatpush.msra.mxu0 %v1046
      %1104 = vmatpush.msra.mxu0 %v1042
      %1105 = vmatpush.msra.mxu0 %v1038
      %1106 = vmatpush.msra.mxu0 %v1034
      %1107 = vmatpush.msra.mxu0 %v1030
      %1108 = vmatpush.msra.mxu0 %v1026
      %1109 = vmatpush.msra.mxu0 %v1022
      %1110 = vmatpush.msra.mxu0 %v1018
      %1111 = vmatpush.msra.mxu0 %v1014
      %1112 = vmatpush.msra.mxu0 %v1010
      %1113 = vmatpush.msra.mxu0 %v1006
      %1114 = vmatpush.msra.mxu0 %v1002
      %1115 = vmatpush.msra.mxu0 %v998
      %1116 = vmatmul.f32.gmra.mxu0 %v986
      %v1117 = vpop.f32.mrf.mxu0
      %v1118 = vadd.f32 0.0, %v1117
      %1119 = vdwg.mxu0
      %1120 = vmatpush.msra.mxu0 %v1059
      %1121 = vmatpush.msra.mxu0 %v1055
      %1122 = vmatpush.msra.mxu0 %v1051
      %1123 = vmatpush.msra.mxu0 %v1047
      %1124 = vmatpush.msra.mxu0 %v1043
      %1125 = vmatpush.msra.mxu0 %v1039
      %1126 = vmatpush.msra.mxu0 %v1035
      %1127 = vmatpush.msra.mxu0 %v1031
      %1128 = vmatpush.msra.mxu0 %v1027
      %1129 = vmatpush.msra.mxu0 %v1023
      %1130 = vmatpush.msra.mxu0 %v1019
      %1131 = vmatpush.msra.mxu0 %v1015
      %1132 = vmatpush.msra.mxu0 %v1011
      %1133 = vmatpush.msra.mxu0 %v1007
      %1134 = vmatpush.msra.mxu0 %v1003
      %1135 = vmatpush.msra.mxu0 %v999
      %1136 = vmatmul.f32.gmra.mxu0 %v986
      %v1137 = vpop.f32.mrf.mxu0
      %v1138 = vadd.f32 0.0, %v1137
      %1139 = vdwg.mxu0
      %v1140 = vadd.f32 %v992, %v1078
      %v1141 = vadd.f32 %v993, %v1098
      %v1142 = vadd.f32 %v994, %v1118
      %v1143 = vadd.f32 %v995, %v1138
      %v1144 = vxor.u32 %v1140, 2147483648
      %v1145 = vxor.u32 %v1141, 2147483648
      %v1146 = vxor.u32 %v1142, 2147483648
      %v1147 = vmul.f32 %v1144, 1.442695
      %v1148 = vpow.pop %v1147
      %v1149 = vmul.f32 %v1145, 1.442695
      %v1150 = vpow.pop %v1149
      %v1151 = vmul.f32 %v1146, 1.442695
      %v1152 = vpow.pop %v1151
      %v1153 = vadd.f32 %v1148, 1.0
      %v1154 = vadd.f32 %v1150, 1.0
      %v1155 = vadd.f32 %v1152, 1.0
      %v1156 = vrcp.pop %v1153
      %v1157 = vmul.f32 %v1153, %v1156
      %v1158 = vsub.f32 1.0, %v1157
      %v1159 = vmul.f32 %v1156, %v1158
      %v1160 = vadd.f32 %v1156, %v1159
      %vm1161 = vweird.f32 %v1153
      %vm1162 = vweird.f32 %v1156
      %vm1163 = vmor %vm1161, %vm1162
      %v1164 = vsel %vm1163, %v1156, %v1160
      %v1165 = vand.u32 2147483647, %v1153
      %vm1166 = vcmp.eq.f32.partialorder %v1165, 8.507059e+37
      %v1167 = vand.u32 %v1153, 2147483648
      %v1168 = vor.u32 1.1754944e-38, %v1167
      %v1169 = vsel %vm1166, %v1168, %v1164
      %v1170 = vmul.f32 1.0, %v1169
      %v1171 = vrcp.pop %v1154
      %v1172 = vmul.f32 %v1154, %v1171
      %v1173 = vsub.f32 1.0, %v1172
      %v1174 = vmul.f32 %v1171, %v1173
      %v1175 = vadd.f32 %v1171, %v1174
      %vm1176 = vweird.f32 %v1154
      %vm1177 = vweird.f32 %v1171
      %vm1178 = vmor %vm1176, %vm1177
      %v1179 = vsel %vm1178, %v1171, %v1175
      %v1180 = vand.u32 2147483647, %v1154
      %vm1181 = vcmp.eq.f32.partialorder %v1180, 8.507059e+37
      %v1182 = vand.u32 %v1154, 2147483648
      %v1183 = vor.u32 1.1754944e-38, %v1182
      %v1184 = vsel %vm1181, %v1183, %v1179
      %v1185 = vmul.f32 1.0, %v1184
      %v1186 = vrcp.pop %v1155
      %v1187 = vmul.f32 %v1155, %v1186
      %v1188 = vsub.f32 1.0, %v1187
      %v1189 = vmul.f32 %v1186, %v1188
      %v1190 = vadd.f32 %v1186, %v1189
      %vm1191 = vweird.f32 %v1155
      %vm1192 = vweird.f32 %v1186
      %vm1193 = vmor %vm1191, %vm1192
      %v1194 = vsel %vm1193, %v1186, %v1190
      %v1195 = vand.u32 2147483647, %v1155
      %vm1196 = vcmp.eq.f32.partialorder %v1195, 8.507059e+37
      %v1197 = vand.u32 %v1155, 2147483648
      %v1198 = vor.u32 1.1754944e-38, %v1197
      %v1199 = vsel %vm1196, %v1198, %v1194
      %v1200 = vmul.f32 1.0, %v1199
      %v1201 = vtanh.pop %v1143
      %v1202 = vmul.f32 %v1185, %v984
      %v1203 = vmul.f32 %v1170, %v1201
      %v1204 = vadd.f32 %v1202, %v1203
      %v1205 = vtanh.pop %v1204
      %v1206 = vmul.f32 %v1200, %v1205
      %s1207 = scalar_lea.vmem [#allocation3], 24
      %1208 = vst [vmem:[%s1207] sm:$0xff] %v1206
      %s1209 = smul.u32 4, 4
      %s1210 = smul.addr %s1209, 8
      %s1211 = scalar_lea.vmem [#allocation2], %s1210
      %v1212 = vld [vmem:[%s1211] sm:$0xff]
      %v1213 = vld [vmem:[%s1211 + $0x8] sm:$0xff]
      %v1214 = vld [vmem:[%s1211 + $0x10] sm:$0xff]
      %v1215 = vld [vmem:[%s1211 + $0x18] sm:$0xff]
      %v1216 = vld [vmem:[#allocation7] sm:$0xff]
      %v1217 = vld [vmem:[#allocation7 + $0x8] sm:$0xff]
      %v1218 = vld [vmem:[#allocation7 + $0x10] sm:$0xff]
      %v1219 = vld [vmem:[#allocation7 + $0x18] sm:$0xff]
      %v1220 = vld [vmem:[#allocation7 + $0x20] sm:$0xff]
      %v1221 = vld [vmem:[#allocation7 + $0x28] sm:$0xff]
      %v1222 = vld [vmem:[#allocation7 + $0x30] sm:$0xff]
      %v1223 = vld [vmem:[#allocation7 + $0x38] sm:$0xff]
      %v1224 = vld [vmem:[#allocation7 + $0x40] sm:$0xff]
      %v1225 = vld [vmem:[#allocation7 + $0x48] sm:$0xff]
      %v1226 = vld [vmem:[#allocation7 + $0x50] sm:$0xff]
      %v1227 = vld [vmem:[#allocation7 + $0x58] sm:$0xff]
      %v1228 = vld [vmem:[#allocation7 + $0x60] sm:$0xff]
      %v1229 = vld [vmem:[#allocation7 + $0x68] sm:$0xff]
      %v1230 = vld [vmem:[#allocation7 + $0x70] sm:$0xff]
      %v1231 = vld [vmem:[#allocation7 + $0x78] sm:$0xff]
      %v1232 = vld [vmem:[#allocation7 + $0x80] sm:$0xff]
      %v1233 = vld [vmem:[#allocation7 + $0x88] sm:$0xff]
      %v1234 = vld [vmem:[#allocation7 + $0x90] sm:$0xff]
      %v1235 = vld [vmem:[#allocation7 + $0x98] sm:$0xff]
      %v1236 = vld [vmem:[#allocation7 + $0xa0] sm:$0xff]
      %v1237 = vld [vmem:[#allocation7 + $0xa8] sm:$0xff]
      %v1238 = vld [vmem:[#allocation7 + $0xb0] sm:$0xff]
      %v1239 = vld [vmem:[#allocation7 + $0xb8] sm:$0xff]
      %v1240 = vld [vmem:[#allocation7 + $0xc0] sm:$0xff]
      %v1241 = vld [vmem:[#allocation7 + $0xc8] sm:$0xff]
      %v1242 = vld [vmem:[#allocation7 + $0xd0] sm:$0xff]
      %v1243 = vld [vmem:[#allocation7 + $0xd8] sm:$0xff]
      %v1244 = vld [vmem:[#allocation7 + $0xe0] sm:$0xff]
      %v1245 = vld [vmem:[#allocation7 + $0xe8] sm:$0xff]
      %v1246 = vld [vmem:[#allocation7 + $0xf0] sm:$0xff]
      %v1247 = vld [vmem:[#allocation7 + $0xf8] sm:$0xff]
      %v1248 = vld [vmem:[#allocation7 + $0x100] sm:$0xff]
      %v1249 = vld [vmem:[#allocation7 + $0x108] sm:$0xff]
      %v1250 = vld [vmem:[#allocation7 + $0x110] sm:$0xff]
      %v1251 = vld [vmem:[#allocation7 + $0x118] sm:$0xff]
      %v1252 = vld [vmem:[#allocation7 + $0x120] sm:$0xff]
      %v1253 = vld [vmem:[#allocation7 + $0x128] sm:$0xff]
      %v1254 = vld [vmem:[#allocation7 + $0x130] sm:$0xff]
      %v1255 = vld [vmem:[#allocation7 + $0x138] sm:$0xff]
      %v1256 = vld [vmem:[#allocation7 + $0x140] sm:$0xff]
      %v1257 = vld [vmem:[#allocation7 + $0x148] sm:$0xff]
      %v1258 = vld [vmem:[#allocation7 + $0x150] sm:$0xff]
      %v1259 = vld [vmem:[#allocation7 + $0x158] sm:$0xff]
      %v1260 = vld [vmem:[#allocation7 + $0x160] sm:$0xff]
      %v1261 = vld [vmem:[#allocation7 + $0x168] sm:$0xff]
      %v1262 = vld [vmem:[#allocation7 + $0x170] sm:$0xff]
      %v1263 = vld [vmem:[#allocation7 + $0x178] sm:$0xff]
      %v1264 = vld [vmem:[#allocation7 + $0x180] sm:$0xff]
      %v1265 = vld [vmem:[#allocation7 + $0x188] sm:$0xff]
      %v1266 = vld [vmem:[#allocation7 + $0x190] sm:$0xff]
      %v1267 = vld [vmem:[#allocation7 + $0x198] sm:$0xff]
      %v1268 = vld [vmem:[#allocation7 + $0x1a0] sm:$0xff]
      %v1269 = vld [vmem:[#allocation7 + $0x1a8] sm:$0xff]
      %v1270 = vld [vmem:[#allocation7 + $0x1b0] sm:$0xff]
      %v1271 = vld [vmem:[#allocation7 + $0x1b8] sm:$0xff]
      %v1272 = vld [vmem:[#allocation7 + $0x1c0] sm:$0xff]
      %v1273 = vld [vmem:[#allocation7 + $0x1c8] sm:$0xff]
      %v1274 = vld [vmem:[#allocation7 + $0x1d0] sm:$0xff]
      %v1275 = vld [vmem:[#allocation7 + $0x1d8] sm:$0xff]
      %v1276 = vld [vmem:[#allocation7 + $0x1e0] sm:$0xff]
      %v1277 = vld [vmem:[#allocation7 + $0x1e8] sm:$0xff]
      %v1278 = vld [vmem:[#allocation7 + $0x1f0] sm:$0xff]
      %v1279 = vld [vmem:[#allocation7 + $0x1f8] sm:$0xff]
      %1280 = vmatpush.msra.mxu0 %v1276
      %1281 = vmatpush.msra.mxu0 %v1272
      %1282 = vmatpush.msra.mxu0 %v1268
      %1283 = vmatpush.msra.mxu0 %v1264
      %1284 = vmatpush.msra.mxu0 %v1260
      %1285 = vmatpush.msra.mxu0 %v1256
      %1286 = vmatpush.msra.mxu0 %v1252
      %1287 = vmatpush.msra.mxu0 %v1248
      %1288 = vmatpush.msra.mxu0 %v1244
      %1289 = vmatpush.msra.mxu0 %v1240
      %1290 = vmatpush.msra.mxu0 %v1236
      %1291 = vmatpush.msra.mxu0 %v1232
      %1292 = vmatpush.msra.mxu0 %v1228
      %1293 = vmatpush.msra.mxu0 %v1224
      %1294 = vmatpush.msra.mxu0 %v1220
      %1295 = vmatpush.msra.mxu0 %v1216
      %1296 = vmatmul.f32.gmra.mxu0 %v1206
      %v1297 = vpop.f32.mrf.mxu0
      %v1298 = vadd.f32 0.0, %v1297
      %1299 = vdwg.mxu0
      %1300 = vmatpush.msra.mxu0 %v1277
      %1301 = vmatpush.msra.mxu0 %v1273
      %1302 = vmatpush.msra.mxu0 %v1269
      %1303 = vmatpush.msra.mxu0 %v1265
      %1304 = vmatpush.msra.mxu0 %v1261
      %1305 = vmatpush.msra.mxu0 %v1257
      %1306 = vmatpush.msra.mxu0 %v1253
      %1307 = vmatpush.msra.mxu0 %v1249
      %1308 = vmatpush.msra.mxu0 %v1245
      %1309 = vmatpush.msra.mxu0 %v1241
      %1310 = vmatpush.msra.mxu0 %v1237
      %1311 = vmatpush.msra.mxu0 %v1233
      %1312 = vmatpush.msra.mxu0 %v1229
      %1313 = vmatpush.msra.mxu0 %v1225
      %1314 = vmatpush.msra.mxu0 %v1221
      %1315 = vmatpush.msra.mxu0 %v1217
      %1316 = vmatmul.f32.gmra.mxu0 %v1206
      %v1317 = vpop.f32.mrf.mxu0
      %v1318 = vadd.f32 0.0, %v1317
      %1319 = vdwg.mxu0
      %1320 = vmatpush.msra.mxu0 %v1278
      %1321 = vmatpush.msra.mxu0 %v1274
      %1322 = vmatpush.msra.mxu0 %v1270
      %1323 = vmatpush.msra.mxu0 %v1266
      %1324 = vmatpush.msra.mxu0 %v1262
      %1325 = vmatpush.msra.mxu0 %v1258
      %1326 = vmatpush.msra.mxu0 %v1254
      %1327 = vmatpush.msra.mxu0 %v1250
      %1328 = vmatpush.msra.mxu0 %v1246
      %1329 = vmatpush.msra.mxu0 %v1242
      %1330 = vmatpush.msra.mxu0 %v1238
      %1331 = vmatpush.msra.mxu0 %v1234
      %1332 = vmatpush.msra.mxu0 %v1230
      %1333 = vmatpush.msra.mxu0 %v1226
      %1334 = vmatpush.msra.mxu0 %v1222
      %1335 = vmatpush.msra.mxu0 %v1218
      %1336 = vmatmul.f32.gmra.mxu0 %v1206
      %v1337 = vpop.f32.mrf.mxu0
      %v1338 = vadd.f32 0.0, %v1337
      %1339 = vdwg.mxu0
      %1340 = vmatpush.msra.mxu0 %v1279
      %1341 = vmatpush.msra.mxu0 %v1275
      %1342 = vmatpush.msra.mxu0 %v1271
      %1343 = vmatpush.msra.mxu0 %v1267
      %1344 = vmatpush.msra.mxu0 %v1263
      %1345 = vmatpush.msra.mxu0 %v1259
      %1346 = vmatpush.msra.mxu0 %v1255
      %1347 = vmatpush.msra.mxu0 %v1251
      %1348 = vmatpush.msra.mxu0 %v1247
      %1349 = vmatpush.msra.mxu0 %v1243
      %1350 = vmatpush.msra.mxu0 %v1239
      %1351 = vmatpush.msra.mxu0 %v1235
      %1352 = vmatpush.msra.mxu0 %v1231
      %1353 = vmatpush.msra.mxu0 %v1227
      %1354 = vmatpush.msra.mxu0 %v1223
      %1355 = vmatpush.msra.mxu0 %v1219
      %1356 = vmatmul.f32.gmra.mxu0 %v1206
      %v1357 = vpop.f32.mrf.mxu0
      %v1358 = vadd.f32 0.0, %v1357
      %1359 = vdwg.mxu0
      %v1360 = vadd.f32 %v1212, %v1298
      %v1361 = vadd.f32 %v1213, %v1318
      %v1362 = vadd.f32 %v1214, %v1338
      %v1363 = vadd.f32 %v1215, %v1358
      %v1364 = vxor.u32 %v1360, 2147483648
      %v1365 = vxor.u32 %v1361, 2147483648
      %v1366 = vxor.u32 %v1362, 2147483648
      %v1367 = vmul.f32 %v1364, 1.442695
      %v1368 = vpow.pop %v1367
      %v1369 = vmul.f32 %v1365, 1.442695
      %v1370 = vpow.pop %v1369
      %v1371 = vmul.f32 %v1366, 1.442695
      %v1372 = vpow.pop %v1371
      %v1373 = vadd.f32 %v1368, 1.0
      %v1374 = vadd.f32 %v1370, 1.0
      %v1375 = vadd.f32 %v1372, 1.0
      %v1376 = vrcp.pop %v1373
      %v1377 = vmul.f32 %v1373, %v1376
      %v1378 = vsub.f32 1.0, %v1377
      %v1379 = vmul.f32 %v1376, %v1378
      %v1380 = vadd.f32 %v1376, %v1379
      %vm1381 = vweird.f32 %v1373
      %vm1382 = vweird.f32 %v1376
      %vm1383 = vmor %vm1381, %vm1382
      %v1384 = vsel %vm1383, %v1376, %v1380
      %v1385 = vand.u32 2147483647, %v1373
      %vm1386 = vcmp.eq.f32.partialorder %v1385, 8.507059e+37
      %v1387 = vand.u32 %v1373, 2147483648
      %v1388 = vor.u32 1.1754944e-38, %v1387
      %v1389 = vsel %vm1386, %v1388, %v1384
      %v1390 = vmul.f32 1.0, %v1389
      %v1391 = vrcp.pop %v1374
      %v1392 = vmul.f32 %v1374, %v1391
      %v1393 = vsub.f32 1.0, %v1392
      %v1394 = vmul.f32 %v1391, %v1393
      %v1395 = vadd.f32 %v1391, %v1394
      %vm1396 = vweird.f32 %v1374
      %vm1397 = vweird.f32 %v1391
      %vm1398 = vmor %vm1396, %vm1397
      %v1399 = vsel %vm1398, %v1391, %v1395
      %v1400 = vand.u32 2147483647, %v1374
      %vm1401 = vcmp.eq.f32.partialorder %v1400, 8.507059e+37
      %v1402 = vand.u32 %v1374, 2147483648
      %v1403 = vor.u32 1.1754944e-38, %v1402
      %v1404 = vsel %vm1401, %v1403, %v1399
      %v1405 = vmul.f32 1.0, %v1404
      %v1406 = vrcp.pop %v1375
      %v1407 = vmul.f32 %v1375, %v1406
      %v1408 = vsub.f32 1.0, %v1407
      %v1409 = vmul.f32 %v1406, %v1408
      %v1410 = vadd.f32 %v1406, %v1409
      %vm1411 = vweird.f32 %v1375
      %vm1412 = vweird.f32 %v1406
      %vm1413 = vmor %vm1411, %vm1412
      %v1414 = vsel %vm1413, %v1406, %v1410
      %v1415 = vand.u32 2147483647, %v1375
      %vm1416 = vcmp.eq.f32.partialorder %v1415, 8.507059e+37
      %v1417 = vand.u32 %v1375, 2147483648
      %v1418 = vor.u32 1.1754944e-38, %v1417
      %v1419 = vsel %vm1416, %v1418, %v1414
      %v1420 = vmul.f32 1.0, %v1419
      %v1421 = vtanh.pop %v1363
      %v1422 = vmul.f32 %v1405, %v1204
      %v1423 = vmul.f32 %v1390, %v1421
      %v1424 = vadd.f32 %v1422, %v1423
      %v1425 = vtanh.pop %v1424
      %v1426 = vmul.f32 %v1420, %v1425
      %s1427 = scalar_lea.vmem [#allocation3], 32
      %1428 = vst [vmem:[%s1427] sm:$0xff] %v1426
      %s1429 = smul.u32 5, 4
      %s1430 = smul.addr %s1429, 8
      %s1431 = scalar_lea.vmem [#allocation2], %s1430
      %v1432 = vld [vmem:[%s1431] sm:$0xff]
      %v1433 = vld [vmem:[%s1431 + $0x8] sm:$0xff]
      %v1434 = vld [vmem:[%s1431 + $0x10] sm:$0xff]
      %v1435 = vld [vmem:[%s1431 + $0x18] sm:$0xff]
      %v1436 = vld [vmem:[#allocation7] sm:$0xff]
      %v1437 = vld [vmem:[#allocation7 + $0x8] sm:$0xff]
      %v1438 = vld [vmem:[#allocation7 + $0x10] sm:$0xff]
      %v1439 = vld [vmem:[#allocation7 + $0x18] sm:$0xff]
      %v1440 = vld [vmem:[#allocation7 + $0x20] sm:$0xff]
      %v1441 = vld [vmem:[#allocation7 + $0x28] sm:$0xff]
      %v1442 = vld [vmem:[#allocation7 + $0x30] sm:$0xff]
      %v1443 = vld [vmem:[#allocation7 + $0x38] sm:$0xff]
      %v1444 = vld [vmem:[#allocation7 + $0x40] sm:$0xff]
      %v1445 = vld [vmem:[#allocation7 + $0x48] sm:$0xff]
      %v1446 = vld [vmem:[#allocation7 + $0x50] sm:$0xff]
      %v1447 = vld [vmem:[#allocation7 + $0x58] sm:$0xff]
      %v1448 = vld [vmem:[#allocation7 + $0x60] sm:$0xff]
      %v1449 = vld [vmem:[#allocation7 + $0x68] sm:$0xff]
      %v1450 = vld [vmem:[#allocation7 + $0x70] sm:$0xff]
      %v1451 = vld [vmem:[#allocation7 + $0x78] sm:$0xff]
      %v1452 = vld [vmem:[#allocation7 + $0x80] sm:$0xff]
      %v1453 = vld [vmem:[#allocation7 + $0x88] sm:$0xff]
      %v1454 = vld [vmem:[#allocation7 + $0x90] sm:$0xff]
      %v1455 = vld [vmem:[#allocation7 + $0x98] sm:$0xff]
      %v1456 = vld [vmem:[#allocation7 + $0xa0] sm:$0xff]
      %v1457 = vld [vmem:[#allocation7 + $0xa8] sm:$0xff]
      %v1458 = vld [vmem:[#allocation7 + $0xb0] sm:$0xff]
      %v1459 = vld [vmem:[#allocation7 + $0xb8] sm:$0xff]
      %v1460 = vld [vmem:[#allocation7 + $0xc0] sm:$0xff]
      %v1461 = vld [vmem:[#allocation7 + $0xc8] sm:$0xff]
      %v1462 = vld [vmem:[#allocation7 + $0xd0] sm:$0xff]
      %v1463 = vld [vmem:[#allocation7 + $0xd8] sm:$0xff]
      %v1464 = vld [vmem:[#allocation7 + $0xe0] sm:$0xff]
      %v1465 = vld [vmem:[#allocation7 + $0xe8] sm:$0xff]
      %v1466 = vld [vmem:[#allocation7 + $0xf0] sm:$0xff]
      %v1467 = vld [vmem:[#allocation7 + $0xf8] sm:$0xff]
      %v1468 = vld [vmem:[#allocation7 + $0x100] sm:$0xff]
      %v1469 = vld [vmem:[#allocation7 + $0x108] sm:$0xff]
      %v1470 = vld [vmem:[#allocation7 + $0x110] sm:$0xff]
      %v1471 = vld [vmem:[#allocation7 + $0x118] sm:$0xff]
      %v1472 = vld [vmem:[#allocation7 + $0x120] sm:$0xff]
      %v1473 = vld [vmem:[#allocation7 + $0x128] sm:$0xff]
      %v1474 = vld [vmem:[#allocation7 + $0x130] sm:$0xff]
      %v1475 = vld [vmem:[#allocation7 + $0x138] sm:$0xff]
      %v1476 = vld [vmem:[#allocation7 + $0x140] sm:$0xff]
      %v1477 = vld [vmem:[#allocation7 + $0x148] sm:$0xff]
      %v1478 = vld [vmem:[#allocation7 + $0x150] sm:$0xff]
      %v1479 = vld [vmem:[#allocation7 + $0x158] sm:$0xff]
      %v1480 = vld [vmem:[#allocation7 + $0x160] sm:$0xff]
      %v1481 = vld [vmem:[#allocation7 + $0x168] sm:$0xff]
      %v1482 = vld [vmem:[#allocation7 + $0x170] sm:$0xff]
      %v1483 = vld [vmem:[#allocation7 + $0x178] sm:$0xff]
      %v1484 = vld [vmem:[#allocation7 + $0x180] sm:$0xff]
      %v1485 = vld [vmem:[#allocation7 + $0x188] sm:$0xff]
      %v1486 = vld [vmem:[#allocation7 + $0x190] sm:$0xff]
      %v1487 = vld [vmem:[#allocation7 + $0x198] sm:$0xff]
      %v1488 = vld [vmem:[#allocation7 + $0x1a0] sm:$0xff]
      %v1489 = vld [vmem:[#allocation7 + $0x1a8] sm:$0xff]
      %v1490 = vld [vmem:[#allocation7 + $0x1b0] sm:$0xff]
      %v1491 = vld [vmem:[#allocation7 + $0x1b8] sm:$0xff]
      %v1492 = vld [vmem:[#allocation7 + $0x1c0] sm:$0xff]
      %v1493 = vld [vmem:[#allocation7 + $0x1c8] sm:$0xff]
      %v1494 = vld [vmem:[#allocation7 + $0x1d0] sm:$0xff]
      %v1495 = vld [vmem:[#allocation7 + $0x1d8] sm:$0xff]
      %v1496 = vld [vmem:[#allocation7 + $0x1e0] sm:$0xff]
      %v1497 = vld [vmem:[#allocation7 + $0x1e8] sm:$0xff]
      %v1498 = vld [vmem:[#allocation7 + $0x1f0] sm:$0xff]
      %v1499 = vld [vmem:[#allocation7 + $0x1f8] sm:$0xff]
      %1500 = vmatpush.msra.mxu0 %v1496
      %1501 = vmatpush.msra.mxu0 %v1492
      %1502 = vmatpush.msra.mxu0 %v1488
      %1503 = vmatpush.msra.mxu0 %v1484
      %1504 = vmatpush.msra.mxu0 %v1480
      %1505 = vmatpush.msra.mxu0 %v1476
      %1506 = vmatpush.msra.mxu0 %v1472
      %1507 = vmatpush.msra.mxu0 %v1468
      %1508 = vmatpush.msra.mxu0 %v1464
      %1509 = vmatpush.msra.mxu0 %v1460
      %1510 = vmatpush.msra.mxu0 %v1456
      %1511 = vmatpush.msra.mxu0 %v1452
      %1512 = vmatpush.msra.mxu0 %v1448
      %1513 = vmatpush.msra.mxu0 %v1444
      %1514 = vmatpush.msra.mxu0 %v1440
      %1515 = vmatpush.msra.mxu0 %v1436
      %1516 = vmatmul.f32.gmra.mxu0 %v1426
      %v1517 = vpop.f32.mrf.mxu0
      %v1518 = vadd.f32 0.0, %v1517
      %1519 = vdwg.mxu0
      %1520 = vmatpush.msra.mxu0 %v1497
      %1521 = vmatpush.msra.mxu0 %v1493
      %1522 = vmatpush.msra.mxu0 %v1489
      %1523 = vmatpush.msra.mxu0 %v1485
      %1524 = vmatpush.msra.mxu0 %v1481
      %1525 = vmatpush.msra.mxu0 %v1477
      %1526 = vmatpush.msra.mxu0 %v1473
      %1527 = vmatpush.msra.mxu0 %v1469
      %1528 = vmatpush.msra.mxu0 %v1465
      %1529 = vmatpush.msra.mxu0 %v1461
      %1530 = vmatpush.msra.mxu0 %v1457
      %1531 = vmatpush.msra.mxu0 %v1453
      %1532 = vmatpush.msra.mxu0 %v1449
      %1533 = vmatpush.msra.mxu0 %v1445
      %1534 = vmatpush.msra.mxu0 %v1441
      %1535 = vmatpush.msra.mxu0 %v1437
      %1536 = vmatmul.f32.gmra.mxu0 %v1426
      %v1537 = vpop.f32.mrf.mxu0
      %v1538 = vadd.f32 0.0, %v1537
      %1539 = vdwg.mxu0
      %1540 = vmatpush.msra.mxu0 %v1498
      %1541 = vmatpush.msra.mxu0 %v1494
      %1542 = vmatpush.msra.mxu0 %v1490
      %1543 = vmatpush.msra.mxu0 %v1486
      %1544 = vmatpush.msra.mxu0 %v1482
      %1545 = vmatpush.msra.mxu0 %v1478
      %1546 = vmatpush.msra.mxu0 %v1474
      %1547 = vmatpush.msra.mxu0 %v1470
      %1548 = vmatpush.msra.mxu0 %v1466
      %1549 = vmatpush.msra.mxu0 %v1462
      %1550 = vmatpush.msra.mxu0 %v1458
      %1551 = vmatpush.msra.mxu0 %v1454
      %1552 = vmatpush.msra.mxu0 %v1450
      %1553 = vmatpush.msra.mxu0 %v1446
      %1554 = vmatpush.msra.mxu0 %v1442
      %1555 = vmatpush.msra.mxu0 %v1438
      %1556 = vmatmul.f32.gmra.mxu0 %v1426
      %v1557 = vpop.f32.mrf.mxu0
      %v1558 = vadd.f32 0.0, %v1557
      %1559 = vdwg.mxu0
      %1560 = vmatpush.msra.mxu0 %v1499
      %1561 = vmatpush.msra.mxu0 %v1495
      %1562 = vmatpush.msra.mxu0 %v1491
      %1563 = vmatpush.msra.mxu0 %v1487
      %1564 = vmatpush.msra.mxu0 %v1483
      %1565 = vmatpush.msra.mxu0 %v1479
      %1566 = vmatpush.msra.mxu0 %v1475
      %1567 = vmatpush.msra.mxu0 %v1471
      %1568 = vmatpush.msra.mxu0 %v1467
      %1569 = vmatpush.msra.mxu0 %v1463
      %1570 = vmatpush.msra.mxu0 %v1459
      %1571 = vmatpush.msra.mxu0 %v1455
      %1572 = vmatpush.msra.mxu0 %v1451
      %1573 = vmatpush.msra.mxu0 %v1447
      %1574 = vmatpush.msra.mxu0 %v1443
      %1575 = vmatpush.msra.mxu0 %v1439
      %1576 = vmatmul.f32.gmra.mxu0 %v1426
      %v1577 = vpop.f32.mrf.mxu0
      %v1578 = vadd.f32 0.0, %v1577
      %1579 = vdwg.mxu0
      %v1580 = vadd.f32 %v1432, %v1518
      %v1581 = vadd.f32 %v1433, %v1538
      %v1582 = vadd.f32 %v1434, %v1558
      %v1583 = vadd.f32 %v1435, %v1578
      %v1584 = vxor.u32 %v1580, 2147483648
      %v1585 = vxor.u32 %v1581, 2147483648
      %v1586 = vxor.u32 %v1582, 2147483648
      %v1587 = vmul.f32 %v1584, 1.442695
      %v1588 = vpow.pop %v1587
      %v1589 = vmul.f32 %v1585, 1.442695
      %v1590 = vpow.pop %v1589
      %v1591 = vmul.f32 %v1586, 1.442695
      %v1592 = vpow.pop %v1591
      %v1593 = vadd.f32 %v1588, 1.0
      %v1594 = vadd.f32 %v1590, 1.0
      %v1595 = vadd.f32 %v1592, 1.0
      %v1596 = vrcp.pop %v1593
      %v1597 = vmul.f32 %v1593, %v1596
      %v1598 = vsub.f32 1.0, %v1597
      %v1599 = vmul.f32 %v1596, %v1598
      %v1600 = vadd.f32 %v1596, %v1599
      %vm1601 = vweird.f32 %v1593
      %vm1602 = vweird.f32 %v1596
      %vm1603 = vmor %vm1601, %vm1602
      %v1604 = vsel %vm1603, %v1596, %v1600
      %v1605 = vand.u32 2147483647, %v1593
      %vm1606 = vcmp.eq.f32.partialorder %v1605, 8.507059e+37
      %v1607 = vand.u32 %v1593, 2147483648
      %v1608 = vor.u32 1.1754944e-38, %v1607
      %v1609 = vsel %vm1606, %v1608, %v1604
      %v1610 = vmul.f32 1.0, %v1609
      %v1611 = vrcp.pop %v1594
      %v1612 = vmul.f32 %v1594, %v1611
      %v1613 = vsub.f32 1.0, %v1612
      %v1614 = vmul.f32 %v1611, %v1613
      %v1615 = vadd.f32 %v1611, %v1614
      %vm1616 = vweird.f32 %v1594
      %vm1617 = vweird.f32 %v1611
      %vm1618 = vmor %vm1616, %vm1617
      %v1619 = vsel %vm1618, %v1611, %v1615
      %v1620 = vand.u32 2147483647, %v1594
      %vm1621 = vcmp.eq.f32.partialorder %v1620, 8.507059e+37
      %v1622 = vand.u32 %v1594, 2147483648
      %v1623 = vor.u32 1.1754944e-38, %v1622
      %v1624 = vsel %vm1621, %v1623, %v1619
      %v1625 = vmul.f32 1.0, %v1624
      %v1626 = vrcp.pop %v1595
      %v1627 = vmul.f32 %v1595, %v1626
      %v1628 = vsub.f32 1.0, %v1627
      %v1629 = vmul.f32 %v1626, %v1628
      %v1630 = vadd.f32 %v1626, %v1629
      %vm1631 = vweird.f32 %v1595
      %vm1632 = vweird.f32 %v1626
      %vm1633 = vmor %vm1631, %vm1632
      %v1634 = vsel %vm1633, %v1626, %v1630
      %v1635 = vand.u32 2147483647, %v1595
      %vm1636 = vcmp.eq.f32.partialorder %v1635, 8.507059e+37
      %v1637 = vand.u32 %v1595, 2147483648
      %v1638 = vor.u32 1.1754944e-38, %v1637
      %v1639 = vsel %vm1636, %v1638, %v1634
      %v1640 = vmul.f32 1.0, %v1639
      %v1641 = vtanh.pop %v1583
      %v1642 = vmul.f32 %v1625, %v1424
      %v1643 = vmul.f32 %v1610, %v1641
      %v1644 = vadd.f32 %v1642, %v1643
      %v1645 = vtanh.pop %v1644
      %v1646 = vmul.f32 %v1640, %v1645
      %s1647 = scalar_lea.vmem [#allocation3], 40
      %1648 = vst [vmem:[%s1647] sm:$0xff] %v1646
      %s1649 = smul.u32 6, 4
      %s1650 = smul.addr %s1649, 8
      %s1651 = scalar_lea.vmem [#allocation2], %s1650
      %v1652 = vld [vmem:[%s1651] sm:$0xff]
      %v1653 = vld [vmem:[%s1651 + $0x8] sm:$0xff]
      %v1654 = vld [vmem:[%s1651 + $0x10] sm:$0xff]
      %v1655 = vld [vmem:[%s1651 + $0x18] sm:$0xff]
      %v1656 = vld [vmem:[#allocation7] sm:$0xff]
      %v1657 = vld [vmem:[#allocation7 + $0x8] sm:$0xff]
      %v1658 = vld [vmem:[#allocation7 + $0x10] sm:$0xff]
      %v1659 = vld [vmem:[#allocation7 + $0x18] sm:$0xff]
      %v1660 = vld [vmem:[#allocation7 + $0x20] sm:$0xff]
      %v1661 = vld [vmem:[#allocation7 + $0x28] sm:$0xff]
      %v1662 = vld [vmem:[#allocation7 + $0x30] sm:$0xff]
      %v1663 = vld [vmem:[#allocation7 + $0x38] sm:$0xff]
      %v1664 = vld [vmem:[#allocation7 + $0x40] sm:$0xff]
      %v1665 = vld [vmem:[#allocation7 + $0x48] sm:$0xff]
      %v1666 = vld [vmem:[#allocation7 + $0x50] sm:$0xff]
      %v1667 = vld [vmem:[#allocation7 + $0x58] sm:$0xff]
      %v1668 = vld [vmem:[#allocation7 + $0x60] sm:$0xff]
      %v1669 = vld [vmem:[#allocation7 + $0x68] sm:$0xff]
      %v1670 = vld [vmem:[#allocation7 + $0x70] sm:$0xff]
      %v1671 = vld [vmem:[#allocation7 + $0x78] sm:$0xff]
      %v1672 = vld [vmem:[#allocation7 + $0x80] sm:$0xff]
      %v1673 = vld [vmem:[#allocation7 + $0x88] sm:$0xff]
      %v1674 = vld [vmem:[#allocation7 + $0x90] sm:$0xff]
      %v1675 = vld [vmem:[#allocation7 + $0x98] sm:$0xff]
      %v1676 = vld [vmem:[#allocation7 + $0xa0] sm:$0xff]
      %v1677 = vld [vmem:[#allocation7 + $0xa8] sm:$0xff]
      %v1678 = vld [vmem:[#allocation7 + $0xb0] sm:$0xff]
      %v1679 = vld [vmem:[#allocation7 + $0xb8] sm:$0xff]
      %v1680 = vld [vmem:[#allocation7 + $0xc0] sm:$0xff]
      %v1681 = vld [vmem:[#allocation7 + $0xc8] sm:$0xff]
      %v1682 = vld [vmem:[#allocation7 + $0xd0] sm:$0xff]
      %v1683 = vld [vmem:[#allocation7 + $0xd8] sm:$0xff]
      %v1684 = vld [vmem:[#allocation7 + $0xe0] sm:$0xff]
      %v1685 = vld [vmem:[#allocation7 + $0xe8] sm:$0xff]
      %v1686 = vld [vmem:[#allocation7 + $0xf0] sm:$0xff]
      %v1687 = vld [vmem:[#allocation7 + $0xf8] sm:$0xff]
      %v1688 = vld [vmem:[#allocation7 + $0x100] sm:$0xff]
      %v1689 = vld [vmem:[#allocation7 + $0x108] sm:$0xff]
      %v1690 = vld [vmem:[#allocation7 + $0x110] sm:$0xff]
      %v1691 = vld [vmem:[#allocation7 + $0x118] sm:$0xff]
      %v1692 = vld [vmem:[#allocation7 + $0x120] sm:$0xff]
      %v1693 = vld [vmem:[#allocation7 + $0x128] sm:$0xff]
      %v1694 = vld [vmem:[#allocation7 + $0x130] sm:$0xff]
      %v1695 = vld [vmem:[#allocation7 + $0x138] sm:$0xff]
      %v1696 = vld [vmem:[#allocation7 + $0x140] sm:$0xff]
      %v1697 = vld [vmem:[#allocation7 + $0x148] sm:$0xff]
      %v1698 = vld [vmem:[#allocation7 + $0x150] sm:$0xff]
      %v1699 = vld [vmem:[#allocation7 + $0x158] sm:$0xff]
      %v1700 = vld [vmem:[#allocation7 + $0x160] sm:$0xff]
      %v1701 = vld [vmem:[#allocation7 + $0x168] sm:$0xff]
      %v1702 = vld [vmem:[#allocation7 + $0x170] sm:$0xff]
      %v1703 = vld [vmem:[#allocation7 + $0x178] sm:$0xff]
      %v1704 = vld [vmem:[#allocation7 + $0x180] sm:$0xff]
      %v1705 = vld [vmem:[#allocation7 + $0x188] sm:$0xff]
      %v1706 = vld [vmem:[#allocation7 + $0x190] sm:$0xff]
      %v1707 = vld [vmem:[#allocation7 + $0x198] sm:$0xff]
      %v1708 = vld [vmem:[#allocation7 + $0x1a0] sm:$0xff]
      %v1709 = vld [vmem:[#allocation7 + $0x1a8] sm:$0xff]
      %v1710 = vld [vmem:[#allocation7 + $0x1b0] sm:$0xff]
      %v1711 = vld [vmem:[#allocation7 + $0x1b8] sm:$0xff]
      %v1712 = vld [vmem:[#allocation7 + $0x1c0] sm:$0xff]
      %v1713 = vld [vmem:[#allocation7 + $0x1c8] sm:$0xff]
      %v1714 = vld [vmem:[#allocation7 + $0x1d0] sm:$0xff]
      %v1715 = vld [vmem:[#allocation7 + $0x1d8] sm:$0xff]
      %v1716 = vld [vmem:[#allocation7 + $0x1e0] sm:$0xff]
      %v1717 = vld [vmem:[#allocation7 + $0x1e8] sm:$0xff]
      %v1718 = vld [vmem:[#allocation7 + $0x1f0] sm:$0xff]
      %v1719 = vld [vmem:[#allocation7 + $0x1f8] sm:$0xff]
      %1720 = vmatpush.msra.mxu0 %v1716
      %1721 = vmatpush.msra.mxu0 %v1712
      %1722 = vmatpush.msra.mxu0 %v1708
      %1723 = vmatpush.msra.mxu0 %v1704
      %1724 = vmatpush.msra.mxu0 %v1700
      %1725 = vmatpush.msra.mxu0 %v1696
      %1726 = vmatpush.msra.mxu0 %v1692
      %1727 = vmatpush.msra.mxu0 %v1688
      %1728 = vmatpush.msra.mxu0 %v1684
      %1729 = vmatpush.msra.mxu0 %v1680
      %1730 = vmatpush.msra.mxu0 %v1676
      %1731 = vmatpush.msra.mxu0 %v1672
      %1732 = vmatpush.msra.mxu0 %v1668
      %1733 = vmatpush.msra.mxu0 %v1664
      %1734 = vmatpush.msra.mxu0 %v1660
      %1735 = vmatpush.msra.mxu0 %v1656
      %1736 = vmatmul.f32.gmra.mxu0 %v1646
      %v1737 = vpop.f32.mrf.mxu0
      %v1738 = vadd.f32 0.0, %v1737
      %1739 = vdwg.mxu0
      %1740 = vmatpush.msra.mxu0 %v1717
      %1741 = vmatpush.msra.mxu0 %v1713
      %1742 = vmatpush.msra.mxu0 %v1709
      %1743 = vmatpush.msra.mxu0 %v1705
      %1744 = vmatpush.msra.mxu0 %v1701
      %1745 = vmatpush.msra.mxu0 %v1697
      %1746 = vmatpush.msra.mxu0 %v1693
      %1747 = vmatpush.msra.mxu0 %v1689
      %1748 = vmatpush.msra.mxu0 %v1685
      %1749 = vmatpush.msra.mxu0 %v1681
      %1750 = vmatpush.msra.mxu0 %v1677
      %1751 = vmatpush.msra.mxu0 %v1673
      %1752 = vmatpush.msra.mxu0 %v1669
      %1753 = vmatpush.msra.mxu0 %v1665
      %1754 = vmatpush.msra.mxu0 %v1661
      %1755 = vmatpush.msra.mxu0 %v1657
      %1756 = vmatmul.f32.gmra.mxu0 %v1646
      %v1757 = vpop.f32.mrf.mxu0
      %v1758 = vadd.f32 0.0, %v1757
      %1759 = vdwg.mxu0
      %1760 = vmatpush.msra.mxu0 %v1718
      %1761 = vmatpush.msra.mxu0 %v1714
      %1762 = vmatpush.msra.mxu0 %v1710
      %1763 = vmatpush.msra.mxu0 %v1706
      %1764 = vmatpush.msra.mxu0 %v1702
      %1765 = vmatpush.msra.mxu0 %v1698
      %1766 = vmatpush.msra.mxu0 %v1694
      %1767 = vmatpush.msra.mxu0 %v1690
      %1768 = vmatpush.msra.mxu0 %v1686
      %1769 = vmatpush.msra.mxu0 %v1682
      %1770 = vmatpush.msra.mxu0 %v1678
      %1771 = vmatpush.msra.mxu0 %v1674
      %1772 = vmatpush.msra.mxu0 %v1670
      %1773 = vmatpush.msra.mxu0 %v1666
      %1774 = vmatpush.msra.mxu0 %v1662
      %1775 = vmatpush.msra.mxu0 %v1658
      %1776 = vmatmul.f32.gmra.mxu0 %v1646
      %v1777 = vpop.f32.mrf.mxu0
      %v1778 = vadd.f32 0.0, %v1777
      %1779 = vdwg.mxu0
      %1780 = vmatpush.msra.mxu0 %v1719
      %1781 = vmatpush.msra.mxu0 %v1715
      %1782 = vmatpush.msra.mxu0 %v1711
      %1783 = vmatpush.msra.mxu0 %v1707
      %1784 = vmatpush.msra.mxu0 %v1703
      %1785 = vmatpush.msra.mxu0 %v1699
      %1786 = vmatpush.msra.mxu0 %v1695
      %1787 = vmatpush.msra.mxu0 %v1691
      %1788 = vmatpush.msra.mxu0 %v1687
      %1789 = vmatpush.msra.mxu0 %v1683
      %1790 = vmatpush.msra.mxu0 %v1679
      %1791 = vmatpush.msra.mxu0 %v1675
      %1792 = vmatpush.msra.mxu0 %v1671
      %1793 = vmatpush.msra.mxu0 %v1667
      %1794 = vmatpush.msra.mxu0 %v1663
      %1795 = vmatpush.msra.mxu0 %v1659
      %1796 = vmatmul.f32.gmra.mxu0 %v1646
      %v1797 = vpop.f32.mrf.mxu0
      %v1798 = vadd.f32 0.0, %v1797
      %1799 = vdwg.mxu0
      %v1800 = vadd.f32 %v1652, %v1738
      %v1801 = vadd.f32 %v1653, %v1758
      %v1802 = vadd.f32 %v1654, %v1778
      %v1803 = vadd.f32 %v1655, %v1798
      %v1804 = vxor.u32 %v1800, 2147483648
      %v1805 = vxor.u32 %v1801, 2147483648
      %v1806 = vxor.u32 %v1802, 2147483648
      %v1807 = vmul.f32 %v1804, 1.442695
      %v1808 = vpow.pop %v1807
      %v1809 = vmul.f32 %v1805, 1.442695
      %v1810 = vpow.pop %v1809
      %v1811 = vmul.f32 %v1806, 1.442695
      %v1812 = vpow.pop %v1811
      %v1813 = vadd.f32 %v1808, 1.0
      %v1814 = vadd.f32 %v1810, 1.0
      %v1815 = vadd.f32 %v1812, 1.0
      %v1816 = vrcp.pop %v1813
      %v1817 = vmul.f32 %v1813, %v1816
      %v1818 = vsub.f32 1.0, %v1817
      %v1819 = vmul.f32 %v1816, %v1818
      %v1820 = vadd.f32 %v1816, %v1819
      %vm1821 = vweird.f32 %v1813
      %vm1822 = vweird.f32 %v1816
      %vm1823 = vmor %vm1821, %vm1822
      %v1824 = vsel %vm1823, %v1816, %v1820
      %v1825 = vand.u32 2147483647, %v1813
      %vm1826 = vcmp.eq.f32.partialorder %v1825, 8.507059e+37
      %v1827 = vand.u32 %v1813, 2147483648
      %v1828 = vor.u32 1.1754944e-38, %v1827
      %v1829 = vsel %vm1826, %v1828, %v1824
      %v1830 = vmul.f32 1.0, %v1829
      %v1831 = vrcp.pop %v1814
      %v1832 = vmul.f32 %v1814, %v1831
      %v1833 = vsub.f32 1.0, %v1832
      %v1834 = vmul.f32 %v1831, %v1833
      %v1835 = vadd.f32 %v1831, %v1834
      %vm1836 = vweird.f32 %v1814
      %vm1837 = vweird.f32 %v1831
      %vm1838 = vmor %vm1836, %vm1837
      %v1839 = vsel %vm1838, %v1831, %v1835
      %v1840 = vand.u32 2147483647, %v1814
      %vm1841 = vcmp.eq.f32.partialorder %v1840, 8.507059e+37
      %v1842 = vand.u32 %v1814, 2147483648
      %v1843 = vor.u32 1.1754944e-38, %v1842
      %v1844 = vsel %vm1841, %v1843, %v1839
      %v1845 = vmul.f32 1.0, %v1844
      %v1846 = vrcp.pop %v1815
      %v1847 = vmul.f32 %v1815, %v1846
      %v1848 = vsub.f32 1.0, %v1847
      %v1849 = vmul.f32 %v1846, %v1848
      %v1850 = vadd.f32 %v1846, %v1849
      %vm1851 = vweird.f32 %v1815
      %vm1852 = vweird.f32 %v1846
      %vm1853 = vmor %vm1851, %vm1852
      %v1854 = vsel %vm1853, %v1846, %v1850
      %v1855 = vand.u32 2147483647, %v1815
      %vm1856 = vcmp.eq.f32.partialorder %v1855, 8.507059e+37
      %v1857 = vand.u32 %v1815, 2147483648
      %v1858 = vor.u32 1.1754944e-38, %v1857
      %v1859 = vsel %vm1856, %v1858, %v1854
      %v1860 = vmul.f32 1.0, %v1859
      %v1861 = vtanh.pop %v1803
      %v1862 = vmul.f32 %v1845, %v1644
      %v1863 = vmul.f32 %v1830, %v1861
      %v1864 = vadd.f32 %v1862, %v1863
      %v1865 = vtanh.pop %v1864
      %v1866 = vmul.f32 %v1860, %v1865
      %s1867 = scalar_lea.vmem [#allocation3], 48
      %1868 = vst [vmem:[%s1867] sm:$0xff] %v1866
      %s1869 = smul.u32 7, 4
      %s1870 = smul.addr %s1869, 8
      %s1871 = scalar_lea.vmem [#allocation2], %s1870
      %v1872 = vld [vmem:[%s1871] sm:$0xff]
      %v1873 = vld [vmem:[%s1871 + $0x8] sm:$0xff]
      %v1874 = vld [vmem:[%s1871 + $0x10] sm:$0xff]
      %v1875 = vld [vmem:[%s1871 + $0x18] sm:$0xff]
      %v1876 = vld [vmem:[#allocation7] sm:$0xff]
      %v1877 = vld [vmem:[#allocation7 + $0x8] sm:$0xff]
      %v1878 = vld [vmem:[#allocation7 + $0x10] sm:$0xff]
      %v1879 = vld [vmem:[#allocation7 + $0x18] sm:$0xff]
      %v1880 = vld [vmem:[#allocation7 + $0x20] sm:$0xff]
      %v1881 = vld [vmem:[#allocation7 + $0x28] sm:$0xff]
      %v1882 = vld [vmem:[#allocation7 + $0x30] sm:$0xff]
      %v1883 = vld [vmem:[#allocation7 + $0x38] sm:$0xff]
      %v1884 = vld [vmem:[#allocation7 + $0x40] sm:$0xff]
      %v1885 = vld [vmem:[#allocation7 + $0x48] sm:$0xff]
      %v1886 = vld [vmem:[#allocation7 + $0x50] sm:$0xff]
      %v1887 = vld [vmem:[#allocation7 + $0x58] sm:$0xff]
      %v1888 = vld [vmem:[#allocation7 + $0x60] sm:$0xff]
      %v1889 = vld [vmem:[#allocation7 + $0x68] sm:$0xff]
      %v1890 = vld [vmem:[#allocation7 + $0x70] sm:$0xff]
      %v1891 = vld [vmem:[#allocation7 + $0x78] sm:$0xff]
      %v1892 = vld [vmem:[#allocation7 + $0x80] sm:$0xff]
      %v1893 = vld [vmem:[#allocation7 + $0x88] sm:$0xff]
      %v1894 = vld [vmem:[#allocation7 + $0x90] sm:$0xff]
      %v1895 = vld [vmem:[#allocation7 + $0x98] sm:$0xff]
      %v1896 = vld [vmem:[#allocation7 + $0xa0] sm:$0xff]
      %v1897 = vld [vmem:[#allocation7 + $0xa8] sm:$0xff]
      %v1898 = vld [vmem:[#allocation7 + $0xb0] sm:$0xff]
      %v1899 = vld [vmem:[#allocation7 + $0xb8] sm:$0xff]
      %v1900 = vld [vmem:[#allocation7 + $0xc0] sm:$0xff]
      %v1901 = vld [vmem:[#allocation7 + $0xc8] sm:$0xff]
      %v1902 = vld [vmem:[#allocation7 + $0xd0] sm:$0xff]
      %v1903 = vld [vmem:[#allocation7 + $0xd8] sm:$0xff]
      %v1904 = vld [vmem:[#allocation7 + $0xe0] sm:$0xff]
      %v1905 = vld [vmem:[#allocation7 + $0xe8] sm:$0xff]
      %v1906 = vld [vmem:[#allocation7 + $0xf0] sm:$0xff]
      %v1907 = vld [vmem:[#allocation7 + $0xf8] sm:$0xff]
      %v1908 = vld [vmem:[#allocation7 + $0x100] sm:$0xff]
      %v1909 = vld [vmem:[#allocation7 + $0x108] sm:$0xff]
      %v1910 = vld [vmem:[#allocation7 + $0x110] sm:$0xff]
      %v1911 = vld [vmem:[#allocation7 + $0x118] sm:$0xff]
      %v1912 = vld [vmem:[#allocation7 + $0x120] sm:$0xff]
      %v1913 = vld [vmem:[#allocation7 + $0x128] sm:$0xff]
      %v1914 = vld [vmem:[#allocation7 + $0x130] sm:$0xff]
      %v1915 = vld [vmem:[#allocation7 + $0x138] sm:$0xff]
      %v1916 = vld [vmem:[#allocation7 + $0x140] sm:$0xff]
      %v1917 = vld [vmem:[#allocation7 + $0x148] sm:$0xff]
      %v1918 = vld [vmem:[#allocation7 + $0x150] sm:$0xff]
      %v1919 = vld [vmem:[#allocation7 + $0x158] sm:$0xff]
      %v1920 = vld [vmem:[#allocation7 + $0x160] sm:$0xff]
      %v1921 = vld [vmem:[#allocation7 + $0x168] sm:$0xff]
      %v1922 = vld [vmem:[#allocation7 + $0x170] sm:$0xff]
      %v1923 = vld [vmem:[#allocation7 + $0x178] sm:$0xff]
      %v1924 = vld [vmem:[#allocation7 + $0x180] sm:$0xff]
      %v1925 = vld [vmem:[#allocation7 + $0x188] sm:$0xff]
      %v1926 = vld [vmem:[#allocation7 + $0x190] sm:$0xff]
      %v1927 = vld [vmem:[#allocation7 + $0x198] sm:$0xff]
      %v1928 = vld [vmem:[#allocation7 + $0x1a0] sm:$0xff]
      %v1929 = vld [vmem:[#allocation7 + $0x1a8] sm:$0xff]
      %v1930 = vld [vmem:[#allocation7 + $0x1b0] sm:$0xff]
      %v1931 = vld [vmem:[#allocation7 + $0x1b8] sm:$0xff]
      %v1932 = vld [vmem:[#allocation7 + $0x1c0] sm:$0xff]
      %v1933 = vld [vmem:[#allocation7 + $0x1c8] sm:$0xff]
      %v1934 = vld [vmem:[#allocation7 + $0x1d0] sm:$0xff]
      %v1935 = vld [vmem:[#allocation7 + $0x1d8] sm:$0xff]
      %v1936 = vld [vmem:[#allocation7 + $0x1e0] sm:$0xff]
      %v1937 = vld [vmem:[#allocation7 + $0x1e8] sm:$0xff]
      %v1938 = vld [vmem:[#allocation7 + $0x1f0] sm:$0xff]
      %v1939 = vld [vmem:[#allocation7 + $0x1f8] sm:$0xff]
      %1940 = vmatpush.msra.mxu0 %v1936
      %1941 = vmatpush.msra.mxu0 %v1932
      %1942 = vmatpush.msra.mxu0 %v1928
      %1943 = vmatpush.msra.mxu0 %v1924
      %1944 = vmatpush.msra.mxu0 %v1920
      %1945 = vmatpush.msra.mxu0 %v1916
      %1946 = vmatpush.msra.mxu0 %v1912
      %1947 = vmatpush.msra.mxu0 %v1908
      %1948 = vmatpush.msra.mxu0 %v1904
      %1949 = vmatpush.msra.mxu0 %v1900
      %1950 = vmatpush.msra.mxu0 %v1896
      %1951 = vmatpush.msra.mxu0 %v1892
      %1952 = vmatpush.msra.mxu0 %v1888
      %1953 = vmatpush.msra.mxu0 %v1884
      %1954 = vmatpush.msra.mxu0 %v1880
      %1955 = vmatpush.msra.mxu0 %v1876
      %1956 = vmatmul.f32.gmra.mxu0 %v1866
      %v1957 = vpop.f32.mrf.mxu0
      %v1958 = vadd.f32 0.0, %v1957
      %1959 = vdwg.mxu0
      %1960 = vmatpush.msra.mxu0 %v1937
      %1961 = vmatpush.msra.mxu0 %v1933
      %1962 = vmatpush.msra.mxu0 %v1929
      %1963 = vmatpush.msra.mxu0 %v1925
      %1964 = vmatpush.msra.mxu0 %v1921
      %1965 = vmatpush.msra.mxu0 %v1917
      %1966 = vmatpush.msra.mxu0 %v1913
      %1967 = vmatpush.msra.mxu0 %v1909
      %1968 = vmatpush.msra.mxu0 %v1905
      %1969 = vmatpush.msra.mxu0 %v1901
      %1970 = vmatpush.msra.mxu0 %v1897
      %1971 = vmatpush.msra.mxu0 %v1893
      %1972 = vmatpush.msra.mxu0 %v1889
      %1973 = vmatpush.msra.mxu0 %v1885
      %1974 = vmatpush.msra.mxu0 %v1881
      %1975 = vmatpush.msra.mxu0 %v1877
      %1976 = vmatmul.f32.gmra.mxu0 %v1866
      %v1977 = vpop.f32.mrf.mxu0
      %v1978 = vadd.f32 0.0, %v1977
      %1979 = vdwg.mxu0
      %1980 = vmatpush.msra.mxu0 %v1938
      %1981 = vmatpush.msra.mxu0 %v1934
      %1982 = vmatpush.msra.mxu0 %v1930
      %1983 = vmatpush.msra.mxu0 %v1926
      %1984 = vmatpush.msra.mxu0 %v1922
      %1985 = vmatpush.msra.mxu0 %v1918
      %1986 = vmatpush.msra.mxu0 %v1914
      %1987 = vmatpush.msra.mxu0 %v1910
      %1988 = vmatpush.msra.mxu0 %v1906
      %1989 = vmatpush.msra.mxu0 %v1902
      %1990 = vmatpush.msra.mxu0 %v1898
      %1991 = vmatpush.msra.mxu0 %v1894
      %1992 = vmatpush.msra.mxu0 %v1890
      %1993 = vmatpush.msra.mxu0 %v1886
      %1994 = vmatpush.msra.mxu0 %v1882
      %1995 = vmatpush.msra.mxu0 %v1878
      %1996 = vmatmul.f32.gmra.mxu0 %v1866
      %v1997 = vpop.f32.mrf.mxu0
      %v1998 = vadd.f32 0.0, %v1997
      %1999 = vdwg.mxu0
      %2000 = vmatpush.msra.mxu0 %v1939
      %2001 = vmatpush.msra.mxu0 %v1935
      %2002 = vmatpush.msra.mxu0 %v1931
      %2003 = vmatpush.msra.mxu0 %v1927
      %2004 = vmatpush.msra.mxu0 %v1923
      %2005 = vmatpush.msra.mxu0 %v1919
      %2006 = vmatpush.msra.mxu0 %v1915
      %2007 = vmatpush.msra.mxu0 %v1911
      %2008 = vmatpush.msra.mxu0 %v1907
      %2009 = vmatpush.msra.mxu0 %v1903
      %2010 = vmatpush.msra.mxu0 %v1899
      %2011 = vmatpush.msra.mxu0 %v1895
      %2012 = vmatpush.msra.mxu0 %v1891
      %2013 = vmatpush.msra.mxu0 %v1887
      %2014 = vmatpush.msra.mxu0 %v1883
      %2015 = vmatpush.msra.mxu0 %v1879
      %2016 = vmatmul.f32.gmra.mxu0 %v1866
      %v2017 = vpop.f32.mrf.mxu0
      %v2018 = vadd.f32 0.0, %v2017
      %2019 = vdwg.mxu0
      %v2020 = vadd.f32 %v1872, %v1958
      %v2021 = vadd.f32 %v1873, %v1978
      %v2022 = vadd.f32 %v1874, %v1998
      %v2023 = vadd.f32 %v1875, %v2018
      %v2024 = vxor.u32 %v2020, 2147483648
      %v2025 = vxor.u32 %v2021, 2147483648
      %v2026 = vxor.u32 %v2022, 2147483648
      %v2027 = vmul.f32 %v2024, 1.442695
      %v2028 = vpow.pop %v2027
      %v2029 = vmul.f32 %v2025, 1.442695
      %v2030 = vpow.pop %v2029
      %v2031 = vmul.f32 %v2026, 1.442695
      %v2032 = vpow.pop %v2031
      %v2033 = vadd.f32 %v2028, 1.0
      %v2034 = vadd.f32 %v2030, 1.0
      %v2035 = vadd.f32 %v2032, 1.0
      %v2036 = vrcp.pop %v2033
      %v2037 = vmul.f32 %v2033, %v2036
      %v2038 = vsub.f32 1.0, %v2037
      %v2039 = vmul.f32 %v2036, %v2038
      %v2040 = vadd.f32 %v2036, %v2039
      %vm2041 = vweird.f32 %v2033
      %vm2042 = vweird.f32 %v2036
      %vm2043 = vmor %vm2041, %vm2042
      %v2044 = vsel %vm2043, %v2036, %v2040
      %v2045 = vand.u32 2147483647, %v2033
      %vm2046 = vcmp.eq.f32.partialorder %v2045, 8.507059e+37
      %v2047 = vand.u32 %v2033, 2147483648
      %v2048 = vor.u32 1.1754944e-38, %v2047
      %v2049 = vsel %vm2046, %v2048, %v2044
      %v2050 = vmul.f32 1.0, %v2049
      %v2051 = vrcp.pop %v2034
      %v2052 = vmul.f32 %v2034, %v2051
      %v2053 = vsub.f32 1.0, %v2052
      %v2054 = vmul.f32 %v2051, %v2053
      %v2055 = vadd.f32 %v2051, %v2054
      %vm2056 = vweird.f32 %v2034
      %vm2057 = vweird.f32 %v2051
      %vm2058 = vmor %vm2056, %vm2057
      %v2059 = vsel %vm2058, %v2051, %v2055
      %v2060 = vand.u32 2147483647, %v2034
      %vm2061 = vcmp.eq.f32.partialorder %v2060, 8.507059e+37
      %v2062 = vand.u32 %v2034, 2147483648
      %v2063 = vor.u32 1.1754944e-38, %v2062
      %v2064 = vsel %vm2061, %v2063, %v2059
      %v2065 = vmul.f32 1.0, %v2064
      %v2066 = vrcp.pop %v2035
      %v2067 = vmul.f32 %v2035, %v2066
      %v2068 = vsub.f32 1.0, %v2067
      %v2069 = vmul.f32 %v2066, %v2068
      %v2070 = vadd.f32 %v2066, %v2069
      %vm2071 = vweird.f32 %v2035
      %vm2072 = vweird.f32 %v2066
      %vm2073 = vmor %vm2071, %vm2072
      %v2074 = vsel %vm2073, %v2066, %v2070
      %v2075 = vand.u32 2147483647, %v2035
      %vm2076 = vcmp.eq.f32.partialorder %v2075, 8.507059e+37
      %v2077 = vand.u32 %v2035, 2147483648
      %v2078 = vor.u32 1.1754944e-38, %v2077
      %v2079 = vsel %vm2076, %v2078, %v2074
      %v2080 = vmul.f32 1.0, %v2079
      %v2081 = vtanh.pop %v2023
      %v2082 = vmul.f32 %v2065, %v1864
      %v2083 = vmul.f32 %v2050, %v2081
      %v2084 = vadd.f32 %v2082, %v2083
      %v2085 = vtanh.pop %v2084
      %v2086 = vmul.f32 %v2080, %v2085
      %s2087 = scalar_lea.vmem [#allocation3], 56
      %2088 = vst [vmem:[%s2087] sm:$0xff] %v2086
    $region41: #{tpu_custom_call.1} parent=1 // pred_fallthru
      _
    %v2089 = vld [vmem:[#allocation3] sm:$0xff]
    %v2090 = vld [vmem:[#allocation3 + $0x8] sm:$0xff]
    %v2091 = vld [vmem:[#allocation3 + $0x10] sm:$0xff]
    %v2092 = vld [vmem:[#allocation3 + $0x18] sm:$0xff]
    %v2093 = vld [vmem:[#allocation3 + $0x20] sm:$0xff]
    %v2094 = vld [vmem:[#allocation3 + $0x28] sm:$0xff]
    %v2095 = vld [vmem:[#allocation3 + $0x30] sm:$0xff]
    %v2096 = vld [vmem:[#allocation3 + $0x38] sm:$0xff]
    %v2097 = vld [vmem:[#allocation9] sm:$0xff]
    %v2098 = vld [vmem:[#allocation9 + $0x8] sm:$0xff]
    %v2099 = vld [vmem:[#allocation9 + $0x10] sm:$0xff]
    %v2100 = vld [vmem:[#allocation9 + $0x18] sm:$0xff]
    %v2101 = vld [vmem:[#allocation9 + $0x20] sm:$0xff]
    %v2102 = vld [vmem:[#allocation9 + $0x28] sm:$0xff]
    %v2103 = vld [vmem:[#allocation9 + $0x30] sm:$0xff]
    %v2104 = vld [vmem:[#allocation9 + $0x38] sm:$0xff]
    %v2105 = vld [vmem:[#allocation9 + $0x40] sm:$0xff]
    %v2106 = vld [vmem:[#allocation9 + $0x48] sm:$0xff]
    %v2107 = vld [vmem:[#allocation9 + $0x50] sm:$0xff]
    %v2108 = vld [vmem:[#allocation9 + $0x58] sm:$0xff]
    %v2109 = vld [vmem:[#allocation9 + $0x60] sm:$0xff]
    %v2110 = vld [vmem:[#allocation9 + $0x68] sm:$0xff]
    %v2111 = vld [vmem:[#allocation9 + $0x70] sm:$0xff]
    %v2112 = vld [vmem:[#allocation9 + $0x78] sm:$0xff]
    %v2113 = vld [vmem:[%s5] sm:$0x1]
    %v2115 = vperm.slane %v2113, 0
    %2117 = vmatpush.msra.mxu0 %v2112
    %2118 = vmatpush.msra.mxu0 %v2111
    %2119 = vmatpush.msra.mxu0 %v2110
    %2120 = vmatpush.msra.mxu0 %v2109
    %2121 = vmatpush.msra.mxu0 %v2108
    %2122 = vmatpush.msra.mxu0 %v2107
    %2123 = vmatpush.msra.mxu0 %v2106
    %2124 = vmatpush.msra.mxu0 %v2105
    %2125 = vmatpush.msra.mxu0 %v2104
    %2126 = vmatpush.msra.mxu0 %v2103
    %2127 = vmatpush.msra.mxu0 %v2102
    %2128 = vmatpush.msra.mxu0 %v2101
    %2129 = vmatpush.msra.mxu0 %v2100
    %2130 = vmatpush.msra.mxu0 %v2099
    %2131 = vmatpush.msra.mxu0 %v2098
    %2132 = vmatpush.msra.mxu0 %v2097
    %2133 = vmatmul.f32.gmra.mxu0 %v2089
    %v2134 = vpop.f32.mrf.mxu0
    %v2135 = vadd.f32 %v2115, %v2134
    %2136 = vmatmul.f32.gmra.mxu0 %v2090
    %v2137 = vpop.f32.mrf.mxu0
    %v2138 = vadd.f32 %v2115, %v2137
    %2139 = vmatmul.f32.gmra.mxu0 %v2091
    %v2140 = vpop.f32.mrf.mxu0
    %v2141 = vadd.f32 %v2115, %v2140
    %2142 = vmatmul.f32.gmra.mxu0 %v2092
    %v2143 = vpop.f32.mrf.mxu0
    %v2144 = vadd.f32 %v2115, %v2143
    %2145 = vmatmul.f32.gmra.mxu0 %v2093
    %v2146 = vpop.f32.mrf.mxu0
    %v2147 = vadd.f32 %v2115, %v2146
    %2148 = vmatmul.f32.gmra.mxu0 %v2094
    %v2149 = vpop.f32.mrf.mxu0
    %v2150 = vadd.f32 %v2115, %v2149
    %2151 = vmatmul.f32.gmra.mxu0 %v2095
    %v2152 = vpop.f32.mrf.mxu0
    %v2153 = vadd.f32 %v2115, %v2152
    %2154 = vmatmul.f32.gmra.mxu0 %v2096
    %v2155 = vpop.f32.mrf.mxu0
    %v2156 = vadd.f32 %v2115, %v2155
    %2157 = vdwg.mxu0
    %2158 = vst [vmem:[#allocation10] sm:$0xff] %v2135
    %2159 = vst [vmem:[#allocation10 + $0x8] sm:$0xff] %v2138
    %2160 = vst [vmem:[#allocation10 + $0x10] sm:$0xff] %v2141
    %2161 = vst [vmem:[#allocation10 + $0x18] sm:$0xff] %v2144
    %2162 = vst [vmem:[#allocation10 + $0x20] sm:$0xff] %v2147
    %2163 = vst [vmem:[#allocation10 + $0x28] sm:$0xff] %v2150
    %2164 = vst [vmem:[#allocation10 + $0x30] sm:$0xff] %v2153
    %2165 = vst [vmem:[#allocation10 + $0x38] sm:$0xff] %v2156
    // Predicated region
    $region42: #{tpu_custom_call.1} parent=1 // pred_check
      _
    $region43: #{tpu_custom_call.1} parent=1 // pred_check_branch
      %2167 = sbr.rel (0) target = $region45
    $region44: #{tpu_custom_call.1} parent=1 // pred_region
      %2169 = vsyncadd [#allocation6], 0
      %s2170 = sshll.u32 [#allocation10], 4
      %s2171 = int_to_ptr.vmem [resolvable:$true] %s2170
      %s2172 = sshll.u32 %s6, 4
      %s2173 = int_to_ptr.hbm [resolvable:$true] %s2172
      %2178 = dma.vmem_to_hbm [thread:$0]  %s2171, 1024, %s2173, [#allocation6], 128, 128, 8
    $region45: #{tpu_custom_call.1} parent=1 // pred_fallthru
      _
    // Predicated region
    $region46: #{tpu_custom_call.1} parent=1 // pred_check
      _
    $region47: #{tpu_custom_call.1} parent=1 // pred_check_branch
      %2180 = sbr.rel (0) target = $region49
    $region48: #{tpu_custom_call.1} parent=1 // pred_region
      %2182 = dma.done [#allocation6], 1024
    $region49: #{tpu_custom_call.1} parent=1 // pred_fallthru
      _
    %2183 = vsyncpa [#allocation5], 1
    %2184 = vsyncpa [#allocation8], 1
    %2185 = vsyncpa [#allocation6], 1

</llo_original>
